<compile_context>
chip_gen: v6e
topology: v6e:2x2x1
jax: 0.10.0
libtpu: 0.0.40
codegen_flags: <defaults>
</compile_context>

<pallas_src>
import functools

import jax
import jax.numpy as jnp
from jax.experimental import pallas as pl
from jax.experimental.pallas import tpu as pltpu


# Which original rows feed output row parity a (nearest-x2 then 3x3, pad 1):
#   a=0 reads rows {i-1 (tap ky=0), i (ky=1,2)};  a=1 reads {i (ky=0,1), i+1 (ky=2)}.
_TAPS_PER_PARITY = {
    0: ((-1, (0,)), (0, (1, 2))),
    1: ((0, (0, 1)), (1, (2,))),
}


def _phase_weights(weight):
    """(Co, C, 3, 3) conv weight -> stacked sub-pixel tap matrices + static tap info.

    Returns
      w_all: (16*Co, C) — 4 phases x 4 taps; each (Co, C) block is the sum of the 3x3
             taps that the nearest upsample duplicates onto the same original pixel.
      taps:  tuple of (phase, ry, rx) matching the row blocks of w_all.
    """
    Co, C = weight.shape[0], weight.shape[1]
    mats, taps = [], []
    for a in range(2):
        for b in range(2):
            phase = a * 2 + b
            for ry, kys in _TAPS_PER_PARITY[a]:
                for rx, kxs in _TAPS_PER_PARITY[b]:
                    m = jnp.zeros((Co, C), weight.dtype)
                    for ky in kys:
                        for kx in kxs:
                            m = m + weight[:, :, ky, kx]
                    mats.append(m)
                    taps.append((phase, ry, rx))
    w_all = jnp.stack(mats, axis=0).reshape(len(mats) * Co, C)
    return w_all, tuple(taps)


def _boundary_masks(H, W):
    """(9, H*W) float masks, one per (ry, rx) in {-1,0,1}^2: conv zero-padding."""
    ri = jnp.arange(H, dtype=jnp.float32)[:, None]
    ci = jnp.arange(W, dtype=jnp.float32)[None, :]
    rows = []
    for ry in (-1, 0, 1):
        for rx in (-1, 0, 1):
            ok = jnp.ones((H, W), jnp.float32)
            if ry == -1:
                ok = ok * (ri >= 1)
            elif ry == 1:
                ok = ok * (ri <= H - 2)
            if rx == -1:
                ok = ok * (ci >= 1)
            elif rx == 1:
                ok = ok * (ci <= W - 2)
            rows.append(ok.reshape(H * W))
    return jnp.stack(rows, axis=0)


def _shift_lanes(r, s):
    """Return r' with r'[:, n] = r[:, n + s]; lanes shifted in from outside are zero."""
    if s == 0:
        return r
    pad = jnp.zeros((r.shape[0], abs(s)), r.dtype)
    if s > 0:
        return jnp.concatenate([r[:, s:], pad], axis=1)
    return jnp.concatenate([pad, r[:, :s]], axis=1)


def _upsample_kernel(x_ref, w_ref, mask_ref, o_ref, *, H, W, Co, eps, taps):
    """Fused sub-pixel conv3x3 + InstanceNorm2d + SiLU for one batch image.

    x_ref:    (C, H*W)      original-resolution input, channels on sublanes
    w_ref:    (16*Co, C)    stacked phase/tap weight matrices (VMEM resident)
    mask_ref: (9, H*W)      conv zero-padding boundary masks per (ry, rx)
    o_ref:    (4, Co, H*W)  phase-major output, phase = 2*row_parity + col_parity
    """
    S = H * W

    # ---- one MXU matmul for all 16 (phase, tap) matrices: (16Co, C) x (C, S) ----
    r_all = jnp.dot(w_ref[...], x_ref[...], preferred_element_type=jnp.float32)

    # ---- shift/mask the narrow (Co-row) tap results, accumulate per output phase ----
    acc = [None, None, None, None]
    for t, (phase, ry, rx) in enumerate(taps):
        r = r_all[t * Co:(t + 1) * Co, :]            # aligned sublane slice (Co, S)
        r = _shift_lanes(r, ry * W + rx)             # lane shift of 16 sublanes only
        if ry != 0 or rx != 0:                       # conv zero-padding at the borders
            k = (ry + 1) * 3 + (rx + 1)
            r = r * mask_ref[k:k + 1, :]
        acc[phase] = r if acc[phase] is None else acc[phase] + r

    # ---- InstanceNorm2d (affine=False) over all 4 phases = full 2H x 2W image ----
    inv_n = 1.0 / float(4 * S)
    s1 = acc[0].sum(axis=-1, keepdims=True)
    for p in range(1, 4):
        s1 = s1 + acc[p].sum(axis=-1, keepdims=True)
    mu = s1 * inv_n                                  # (Co, 1)
    d = acc[0] - mu
    s2 = (d * d).sum(axis=-1, keepdims=True)
    for p in range(1, 4):
        d = acc[p] - mu
        s2 = s2 + (d * d).sum(axis=-1, keepdims=True)
    inv_std = jax.lax.rsqrt(s2 * inv_n + eps)        # (Co, 1)

    # ---- normalize + SiLU, lane-dense per-phase stores ----
    for p in range(4):
        y = (acc[p] - mu) * inv_std
        z = y * (1.0 / (1.0 + jnp.exp(-y)))
        o_ref[p, :, :] = z.astype(o_ref.dtype)


def upsample_forward(x, weight, *, eps=1e-5, compute_dtype=None):
    """x: (B, C, H, W); weight: (Co, C, 3, 3) (module uses Co = C // 2).

    Returns SiLU(InstanceNorm(Conv3x3(nearest_x2(x)))) of shape (B, Co, 2H, 2W), x.dtype.
    `compute_dtype` (e.g. jnp.bfloat16 on v6e/v7x) optionally narrows the matmul inputs;
    accumulation and all post-matmul math stay in float32.
    """
    B, C, H, W = x.shape
    Co = weight.shape[0]
    assert weight.shape == (Co, C, 3, 3)
    S = H * W

    w_all, taps = _phase_weights(weight.astype(jnp.float32))
    masks = _boundary_masks(H, W)

    in_dtype = compute_dtype if compute_dtype is not None else x.dtype
    x_flat = x.reshape(B, C, S).astype(in_dtype)     # free reshape — no upsampled copy
    w_all = w_all.astype(in_dtype)

    kernel = functools.partial(_upsample_kernel, H=H, W=W, Co=Co,
                               eps=float(eps), taps=taps)

    n_taps = len(taps)
    itm = jnp.dtype(in_dtype).itemsize
    cost = pl.CostEstimate(
        flops=2 * B * n_taps * Co * C * S,
        transcendentals=B * 4 * Co * S,
        bytes_accessed=int(x_flat.size * itm + w_all.size * itm + masks.size * 4
                           + B * 4 * Co * S * jnp.dtype(x.dtype).itemsize),
    )

    out_ph = pl.pallas_call(
        kernel,
        out_shape=jax.ShapeDtypeStruct((B, 4, Co, S), x.dtype),
        grid=(B,),
        in_specs=[
            pl.BlockSpec((None, C, S), lambda b: (b, 0, 0)),       # (C, S) lane-dense
            pl.BlockSpec((n_taps * Co, C), lambda b: (0, 0)),      # weights, resident
            pl.BlockSpec((9, S), lambda b: (0, 0)),                # masks, resident
        ],
        out_specs=pl.BlockSpec((None, 4, Co, S), lambda b: (b, 0, 0, 0)),
        compiler_params=pltpu.CompilerParams(
            dimension_semantics=("parallel",),
            vmem_limit_bytes=32 * 1024 * 1024,
        ),
        cost_estimate=cost,
    )(x_flat, w_all, masks)

    # De-interleave phases: (B, a, b, Co, H, W) -> (B, Co, 2H, 2W) — one fused XLA copy.
    out = out_ph.reshape(B, 2, 2, Co, H, W).transpose(0, 3, 4, 1, 5, 2)
    return out.reshape(B, Co, 2 * H, 2 * W)


def reference_upsample(x, weight, eps=1e-5):
    """Pure-JAX reference of the PyTorch module forward."""
    xf = x.astype(jnp.float32)
    wf = weight.astype(jnp.float32)
    up = jnp.repeat(jnp.repeat(xf, 2, axis=2), 2, axis=3)         # nearest x2, NCHW
    conv = jax.lax.conv_general_dilated(
        up, wf, window_strides=(1, 1), padding=((1, 1), (1, 1)),
        dimension_numbers=("NCHW", "OIHW", "NCHW"))
    mu = jnp.mean(conv, axis=(2, 3), keepdims=True)
    var = jnp.mean((conv - mu) ** 2, axis=(2, 3), keepdims=True)
    y = (conv - mu) / jnp.sqrt(var + eps)
    return (y * jax.nn.sigmoid(y)).astype(x.dtype)


if __name__ == "__main__":
    key = jax.random.PRNGKey(0)
    kx, kw = jax.random.split(key)

    B, C, H, W = 2, 32, 16, 16        # module default num_ch=32 -> Co=16
    Co = C // 2
    x = jax.random.normal(kx, (B, C, H, W), dtype=jnp.float32)
    weight = jax.random.normal(kw, (Co, C, 3, 3), dtype=jnp.float32) * 0.1

    out = jax.jit(upsample_forward)(x, weight)
    out = jax.block_until_ready(out)

    ref = reference_upsample(x, weight)
    assert out.shape == (B, Co, 2 * H, 2 * W) and out.dtype == x.dtype
    err = float(jnp.max(jnp.abs(out.astype(jnp.float32) - ref.astype(jnp.float32))))
    assert err < 1e-3, f"max abs err {err}"

    print("KERNEL_OK")
</pallas_src>

<mosaic_0001>
module attributes {stable_mosaic.version = 11 : i64} {
  func.func @_upsample_kernel(%arg0: i32, %arg1: memref<1x32x256xf32, #tpu.memory_space<vmem>>, %arg2: memref<256x32xf32, #tpu.memory_space<vmem>>, %arg3: memref<9x256xf32, #tpu.memory_space<vmem>>, %arg4: memref<1x4x16x256xf32, #tpu.memory_space<vmem>>) attributes {dimension_semantics = [#tpu.dimension_semantics<parallel>], iteration_bounds = array<i64: 2>, scalar_prefetch = 0 : i64, scratch_operands = 0 : i64, tpu.core_type = #tpu.core_type<tc>, window_params = [{transform_indices = @transform_0, window_bounds = array<i64: 1, 32, 256>}, {pipeline_mode = #tpu.pipeline_mode<synchronous>, transform_indices = @transform_1, window_bounds = array<i64: 256, 32>}, {pipeline_mode = #tpu.pipeline_mode<synchronous>, transform_indices = @transform_2, window_bounds = array<i64: 9, 256>}, {transform_indices = @transform_3, window_bounds = array<i64: 1, 4, 16, 256>}]} {
    %c0 = arith.constant 0 : index
    %c0_0 = arith.constant 0 : index
    %0 = vector.load %arg2[%c0, %c0_0] : memref<256x32xf32, #tpu.memory_space<vmem>>, vector<256x32xf32>
    %c0_1 = arith.constant 0 : index
    %c0_2 = arith.constant 0 : index
    %c0_3 = arith.constant 0 : index
    %1 = vector.load %arg1[%c0_1, %c0_2, %c0_3] : memref<1x32x256xf32, #tpu.memory_space<vmem>>, vector<1x32x256xf32>
    %2 = vector.shape_cast %1 : vector<1x32x256xf32> to vector<32x256xf32>
    %cst = arith.constant dense<0.000000e+00> : vector<256x256xf32>
    %3 = tpu.matmul %0, %2, %cst {dimension_numbers = #tpu.dot_dimension_numbers<[1], [0], [0], [1], [0, 0, 1, 1], [], []>} : vector<256x32xf32>, vector<32x256xf32>, vector<256x256xf32> -> vector<256x256xf32>
    %4 = vector.extract_strided_slice %3 {offsets = [0, 0], sizes = [16, 256], strides = [1, 1]} : vector<256x256xf32> to vector<16x256xf32>
    %cst_4 = arith.constant 0.000000e+00 : f32
    %5 = vector.broadcast %cst_4 : f32 to vector<16x17xf32>
    %6 = vector.extract_strided_slice %4 {offsets = [0, 0], sizes = [16, 239], strides = [1, 1]} : vector<16x256xf32> to vector<16x239xf32>
    %7 = tpu.concatenate %5, %6 in 1 : vector<16x17xf32>, vector<16x239xf32> -> vector<16x256xf32>
    %c0_5 = arith.constant 0 : index
    %c0_6 = arith.constant 0 : index
    %8 = vector.load %arg3[%c0_5, %c0_6] : memref<9x256xf32, #tpu.memory_space<vmem>>, vector<1x256xf32>
    %9 = vector.broadcast %8 : vector<1x256xf32> to vector<16x256xf32>
    %10 = arith.mulf %7, %9 : vector<16x256xf32>
    %11 = vector.extract_strided_slice %3 {offsets = [16, 0], sizes = [16, 256], strides = [1, 1]} : vector<256x256xf32> to vector<16x256xf32>
    %cst_7 = arith.constant 0.000000e+00 : f32
    %12 = vector.broadcast %cst_7 : f32 to vector<16x16xf32>
    %13 = vector.extract_strided_slice %11 {offsets = [0, 0], sizes = [16, 240], strides = [1, 1]} : vector<16x256xf32> to vector<16x240xf32>
    %14 = tpu.concatenate %12, %13 in 1 : vector<16x16xf32>, vector<16x240xf32> -> vector<16x256xf32>
    %c1 = arith.constant 1 : index
    %c0_8 = arith.constant 0 : index
    %15 = vector.load %arg3[%c1, %c0_8] : memref<9x256xf32, #tpu.memory_space<vmem>>, vector<1x256xf32>
    %16 = vector.broadcast %15 : vector<1x256xf32> to vector<16x256xf32>
    %17 = arith.mulf %14, %16 : vector<16x256xf32>
    %18 = arith.addf %10, %17 : vector<16x256xf32>
    %19 = vector.extract_strided_slice %3 {offsets = [32, 0], sizes = [16, 256], strides = [1, 1]} : vector<256x256xf32> to vector<16x256xf32>
    %cst_9 = arith.constant 0.000000e+00 : f32
    %20 = vector.broadcast %cst_9 : f32 to vector<16x1xf32>
    %21 = vector.extract_strided_slice %19 {offsets = [0, 0], sizes = [16, 255], strides = [1, 1]} : vector<16x256xf32> to vector<16x255xf32>
    %22 = tpu.concatenate %20, %21 in 1 : vector<16x1xf32>, vector<16x255xf32> -> vector<16x256xf32>
    %c3 = arith.constant 3 : index
    %c0_10 = arith.constant 0 : index
    %23 = vector.load %arg3[%c3, %c0_10] : memref<9x256xf32, #tpu.memory_space<vmem>>, vector<1x256xf32>
    %24 = vector.broadcast %23 : vector<1x256xf32> to vector<16x256xf32>
    %25 = arith.mulf %22, %24 : vector<16x256xf32>
    %26 = arith.addf %18, %25 : vector<16x256xf32>
    %27 = vector.extract_strided_slice %3 {offsets = [48, 0], sizes = [16, 256], strides = [1, 1]} : vector<256x256xf32> to vector<16x256xf32>
    %28 = arith.addf %26, %27 : vector<16x256xf32>
    %29 = vector.extract_strided_slice %3 {offsets = [64, 0], sizes = [16, 256], strides = [1, 1]} : vector<256x256xf32> to vector<16x256xf32>
    %cst_11 = arith.constant 0.000000e+00 : f32
    %30 = vector.broadcast %cst_11 : f32 to vector<16x16xf32>
    %31 = vector.extract_strided_slice %29 {offsets = [0, 0], sizes = [16, 240], strides = [1, 1]} : vector<16x256xf32> to vector<16x240xf32>
    %32 = tpu.concatenate %30, %31 in 1 : vector<16x16xf32>, vector<16x240xf32> -> vector<16x256xf32>
    %c1_12 = arith.constant 1 : index
    %c0_13 = arith.constant 0 : index
    %33 = vector.load %arg3[%c1_12, %c0_13] : memref<9x256xf32, #tpu.memory_space<vmem>>, vector<1x256xf32>
    %34 = vector.broadcast %33 : vector<1x256xf32> to vector<16x256xf32>
    %35 = arith.mulf %32, %34 : vector<16x256xf32>
    %36 = vector.extract_strided_slice %3 {offsets = [80, 0], sizes = [16, 256], strides = [1, 1]} : vector<256x256xf32> to vector<16x256xf32>
    %cst_14 = arith.constant 0.000000e+00 : f32
    %37 = vector.broadcast %cst_14 : f32 to vector<16x15xf32>
    %38 = vector.extract_strided_slice %36 {offsets = [0, 0], sizes = [16, 241], strides = [1, 1]} : vector<16x256xf32> to vector<16x241xf32>
    %39 = tpu.concatenate %37, %38 in 1 : vector<16x15xf32>, vector<16x241xf32> -> vector<16x256xf32>
    %c2 = arith.constant 2 : index
    %c0_15 = arith.constant 0 : index
    %40 = vector.load %arg3[%c2, %c0_15] : memref<9x256xf32, #tpu.memory_space<vmem>>, vector<1x256xf32>
    %41 = vector.broadcast %40 : vector<1x256xf32> to vector<16x256xf32>
    %42 = arith.mulf %39, %41 : vector<16x256xf32>
    %43 = arith.addf %35, %42 : vector<16x256xf32>
    %44 = vector.extract_strided_slice %3 {offsets = [96, 0], sizes = [16, 256], strides = [1, 1]} : vector<256x256xf32> to vector<16x256xf32>
    %45 = arith.addf %43, %44 : vector<16x256xf32>
    %46 = vector.extract_strided_slice %3 {offsets = [112, 0], sizes = [16, 256], strides = [1, 1]} : vector<256x256xf32> to vector<16x256xf32>
    %cst_16 = arith.constant 0.000000e+00 : f32
    %47 = vector.broadcast %cst_16 : f32 to vector<16x1xf32>
    %48 = vector.extract_strided_slice %46 {offsets = [0, 1], sizes = [16, 255], strides = [1, 1]} : vector<16x256xf32> to vector<16x255xf32>
    %49 = tpu.concatenate %48, %47 in 1 : vector<16x255xf32>, vector<16x1xf32> -> vector<16x256xf32>
    %c5 = arith.constant 5 : index
    %c0_17 = arith.constant 0 : index
    %50 = vector.load %arg3[%c5, %c0_17] : memref<9x256xf32, #tpu.memory_space<vmem>>, vector<1x256xf32>
    %51 = vector.broadcast %50 : vector<1x256xf32> to vector<16x256xf32>
    %52 = arith.mulf %49, %51 : vector<16x256xf32>
    %53 = arith.addf %45, %52 : vector<16x256xf32>
    %54 = vector.extract_strided_slice %3 {offsets = [128, 0], sizes = [16, 256], strides = [1, 1]} : vector<256x256xf32> to vector<16x256xf32>
    %cst_18 = arith.constant 0.000000e+00 : f32
    %55 = vector.broadcast %cst_18 : f32 to vector<16x1xf32>
    %56 = vector.extract_strided_slice %54 {offsets = [0, 0], sizes = [16, 255], strides = [1, 1]} : vector<16x256xf32> to vector<16x255xf32>
    %57 = tpu.concatenate %55, %56 in 1 : vector<16x1xf32>, vector<16x255xf32> -> vector<16x256xf32>
    %c3_19 = arith.constant 3 : index
    %c0_20 = arith.constant 0 : index
    %58 = vector.load %arg3[%c3_19, %c0_20] : memref<9x256xf32, #tpu.memory_space<vmem>>, vector<1x256xf32>
    %59 = vector.broadcast %58 : vector<1x256xf32> to vector<16x256xf32>
    %60 = arith.mulf %57, %59 : vector<16x256xf32>
    %61 = vector.extract_strided_slice %3 {offsets = [144, 0], sizes = [16, 256], strides = [1, 1]} : vector<256x256xf32> to vector<16x256xf32>
    %62 = arith.addf %60, %61 : vector<16x256xf32>
    %63 = vector.extract_strided_slice %3 {offsets = [160, 0], sizes = [16, 256], strides = [1, 1]} : vector<256x256xf32> to vector<16x256xf32>
    %cst_21 = arith.constant 0.000000e+00 : f32
    %64 = vector.broadcast %cst_21 : f32 to vector<16x15xf32>
    %65 = vector.extract_strided_slice %63 {offsets = [0, 15], sizes = [16, 241], strides = [1, 1]} : vector<16x256xf32> to vector<16x241xf32>
    %66 = tpu.concatenate %65, %64 in 1 : vector<16x241xf32>, vector<16x15xf32> -> vector<16x256xf32>
    %c6 = arith.constant 6 : index
    %c0_22 = arith.constant 0 : index
    %67 = vector.load %arg3[%c6, %c0_22] : memref<9x256xf32, #tpu.memory_space<vmem>>, vector<1x256xf32>
    %68 = vector.broadcast %67 : vector<1x256xf32> to vector<16x256xf32>
    %69 = arith.mulf %66, %68 : vector<16x256xf32>
    %70 = arith.addf %62, %69 : vector<16x256xf32>
    %71 = vector.extract_strided_slice %3 {offsets = [176, 0], sizes = [16, 256], strides = [1, 1]} : vector<256x256xf32> to vector<16x256xf32>
    %cst_23 = arith.constant 0.000000e+00 : f32
    %72 = vector.broadcast %cst_23 : f32 to vector<16x16xf32>
    %73 = vector.extract_strided_slice %71 {offsets = [0, 16], sizes = [16, 240], strides = [1, 1]} : vector<16x256xf32> to vector<16x240xf32>
    %74 = tpu.concatenate %73, %72 in 1 : vector<16x240xf32>, vector<16x16xf32> -> vector<16x256xf32>
    %c7 = arith.constant 7 : index
    %c0_24 = arith.constant 0 : index
    %75 = vector.load %arg3[%c7, %c0_24] : memref<9x256xf32, #tpu.memory_space<vmem>>, vector<1x256xf32>
    %76 = vector.broadcast %75 : vector<1x256xf32> to vector<16x256xf32>
    %77 = arith.mulf %74, %76 : vector<16x256xf32>
    %78 = arith.addf %70, %77 : vector<16x256xf32>
    %79 = vector.extract_strided_slice %3 {offsets = [192, 0], sizes = [16, 256], strides = [1, 1]} : vector<256x256xf32> to vector<16x256xf32>
    %80 = vector.extract_strided_slice %3 {offsets = [208, 0], sizes = [16, 256], strides = [1, 1]} : vector<256x256xf32> to vector<16x256xf32>
    %cst_25 = arith.constant 0.000000e+00 : f32
    %81 = vector.broadcast %cst_25 : f32 to vector<16x1xf32>
    %82 = vector.extract_strided_slice %80 {offsets = [0, 1], sizes = [16, 255], strides = [1, 1]} : vector<16x256xf32> to vector<16x255xf32>
    %83 = tpu.concatenate %82, %81 in 1 : vector<16x255xf32>, vector<16x1xf32> -> vector<16x256xf32>
    %c5_26 = arith.constant 5 : index
    %c0_27 = arith.constant 0 : index
    %84 = vector.load %arg3[%c5_26, %c0_27] : memref<9x256xf32, #tpu.memory_space<vmem>>, vector<1x256xf32>
    %85 = vector.broadcast %84 : vector<1x256xf32> to vector<16x256xf32>
    %86 = arith.mulf %83, %85 : vector<16x256xf32>
    %87 = arith.addf %79, %86 : vector<16x256xf32>
    %88 = vector.extract_strided_slice %3 {offsets = [224, 0], sizes = [16, 256], strides = [1, 1]} : vector<256x256xf32> to vector<16x256xf32>
    %cst_28 = arith.constant 0.000000e+00 : f32
    %89 = vector.broadcast %cst_28 : f32 to vector<16x16xf32>
    %90 = vector.extract_strided_slice %88 {offsets = [0, 16], sizes = [16, 240], strides = [1, 1]} : vector<16x256xf32> to vector<16x240xf32>
    %91 = tpu.concatenate %90, %89 in 1 : vector<16x240xf32>, vector<16x16xf32> -> vector<16x256xf32>
    %c7_29 = arith.constant 7 : index
    %c0_30 = arith.constant 0 : index
    %92 = vector.load %arg3[%c7_29, %c0_30] : memref<9x256xf32, #tpu.memory_space<vmem>>, vector<1x256xf32>
    %93 = vector.broadcast %92 : vector<1x256xf32> to vector<16x256xf32>
    %94 = arith.mulf %91, %93 : vector<16x256xf32>
    %95 = arith.addf %87, %94 : vector<16x256xf32>
    %96 = vector.extract_strided_slice %3 {offsets = [240, 0], sizes = [16, 256], strides = [1, 1]} : vector<256x256xf32> to vector<16x256xf32>
    %cst_31 = arith.constant 0.000000e+00 : f32
    %97 = vector.broadcast %cst_31 : f32 to vector<16x17xf32>
    %98 = vector.extract_strided_slice %96 {offsets = [0, 17], sizes = [16, 239], strides = [1, 1]} : vector<16x256xf32> to vector<16x239xf32>
    %99 = tpu.concatenate %98, %97 in 1 : vector<16x239xf32>, vector<16x17xf32> -> vector<16x256xf32>
    %c8 = arith.constant 8 : index
    %c0_32 = arith.constant 0 : index
    %100 = vector.load %arg3[%c8, %c0_32] : memref<9x256xf32, #tpu.memory_space<vmem>>, vector<1x256xf32>
    %101 = vector.broadcast %100 : vector<1x256xf32> to vector<16x256xf32>
    %102 = arith.mulf %99, %101 : vector<16x256xf32>
    %103 = arith.addf %95, %102 : vector<16x256xf32>
    %cst_33 = arith.constant dense<0.000000e+00> : vector<16xf32>
    %104 = vector.multi_reduction <add>, %28, %cst_33 [1] : vector<16x256xf32> to vector<16xf32>
    %105 = vector.shape_cast %104 : vector<16xf32> to vector<16x1xf32>
    %cst_34 = arith.constant dense<0.000000e+00> : vector<16xf32>
    %106 = vector.multi_reduction <add>, %53, %cst_34 [1] : vector<16x256xf32> to vector<16xf32>
    %107 = vector.shape_cast %106 : vector<16xf32> to vector<16x1xf32>
    %108 = arith.addf %105, %107 : vector<16x1xf32>
    %cst_35 = arith.constant dense<0.000000e+00> : vector<16xf32>
    %109 = vector.multi_reduction <add>, %78, %cst_35 [1] : vector<16x256xf32> to vector<16xf32>
    %110 = vector.shape_cast %109 : vector<16xf32> to vector<16x1xf32>
    %111 = arith.addf %108, %110 : vector<16x1xf32>
    %cst_36 = arith.constant dense<0.000000e+00> : vector<16xf32>
    %112 = vector.multi_reduction <add>, %103, %cst_36 [1] : vector<16x256xf32> to vector<16xf32>
    %113 = vector.shape_cast %112 : vector<16xf32> to vector<16x1xf32>
    %114 = arith.addf %111, %113 : vector<16x1xf32>
    %cst_37 = arith.constant 9.765625E-4 : f32
    %115 = vector.broadcast %cst_37 : f32 to vector<16x1xf32>
    %116 = arith.mulf %114, %115 : vector<16x1xf32>
    %117 = vector.broadcast %116 : vector<16x1xf32> to vector<16x256xf32>
    %118 = arith.subf %28, %117 : vector<16x256xf32>
    %119 = arith.mulf %118, %118 : vector<16x256xf32>
    %cst_38 = arith.constant dense<0.000000e+00> : vector<16xf32>
    %120 = vector.multi_reduction <add>, %119, %cst_38 [1] : vector<16x256xf32> to vector<16xf32>
    %121 = vector.shape_cast %120 : vector<16xf32> to vector<16x1xf32>
    %122 = vector.broadcast %116 : vector<16x1xf32> to vector<16x256xf32>
    %123 = arith.subf %53, %122 : vector<16x256xf32>
    %124 = arith.mulf %123, %123 : vector<16x256xf32>
    %cst_39 = arith.constant dense<0.000000e+00> : vector<16xf32>
    %125 = vector.multi_reduction <add>, %124, %cst_39 [1] : vector<16x256xf32> to vector<16xf32>
    %126 = vector.shape_cast %125 : vector<16xf32> to vector<16x1xf32>
    %127 = arith.addf %121, %126 : vector<16x1xf32>
    %128 = vector.broadcast %116 : vector<16x1xf32> to vector<16x256xf32>
    %129 = arith.subf %78, %128 : vector<16x256xf32>
    %130 = arith.mulf %129, %129 : vector<16x256xf32>
    %cst_40 = arith.constant dense<0.000000e+00> : vector<16xf32>
    %131 = vector.multi_reduction <add>, %130, %cst_40 [1] : vector<16x256xf32> to vector<16xf32>
    %132 = vector.shape_cast %131 : vector<16xf32> to vector<16x1xf32>
    %133 = arith.addf %127, %132 : vector<16x1xf32>
    %134 = vector.broadcast %116 : vector<16x1xf32> to vector<16x256xf32>
    %135 = arith.subf %103, %134 : vector<16x256xf32>
    %136 = arith.mulf %135, %135 : vector<16x256xf32>
    %cst_41 = arith.constant dense<0.000000e+00> : vector<16xf32>
    %137 = vector.multi_reduction <add>, %136, %cst_41 [1] : vector<16x256xf32> to vector<16xf32>
    %138 = vector.shape_cast %137 : vector<16xf32> to vector<16x1xf32>
    %139 = arith.addf %133, %138 : vector<16x1xf32>
    %cst_42 = arith.constant 9.765625E-4 : f32
    %140 = vector.broadcast %cst_42 : f32 to vector<16x1xf32>
    %141 = arith.mulf %139, %140 : vector<16x1xf32>
    %cst_43 = arith.constant 9.99999974E-6 : f32
    %142 = vector.broadcast %cst_43 : f32 to vector<16x1xf32>
    %143 = arith.addf %141, %142 : vector<16x1xf32>
    %144 = math.rsqrt %143 : vector<16x1xf32>
    %145 = vector.broadcast %116 : vector<16x1xf32> to vector<16x256xf32>
    %146 = arith.subf %28, %145 : vector<16x256xf32>
    %147 = vector.broadcast %144 : vector<16x1xf32> to vector<16x256xf32>
    %148 = arith.mulf %146, %147 : vector<16x256xf32>
    %cst_44 = arith.constant 0.000000e+00 : f32
    %149 = vector.broadcast %cst_44 : f32 to vector<16x256xf32>
    %150 = arith.subf %149, %148 : vector<16x256xf32>
    %151 = math.exp %150 : vector<16x256xf32>
    %cst_45 = arith.constant 1.000000e+00 : f32
    %152 = vector.broadcast %cst_45 : f32 to vector<16x256xf32>
    %153 = arith.addf %152, %151 : vector<16x256xf32>
    %cst_46 = arith.constant 1.000000e+00 : f32
    %154 = vector.broadcast %cst_46 : f32 to vector<16x256xf32>
    %155 = arith.divf %154, %153 : vector<16x256xf32>
    %156 = arith.mulf %148, %155 : vector<16x256xf32>
    %c0_47 = arith.constant 0 : index
    %c0_48 = arith.constant 0 : index
    %c0_49 = arith.constant 0 : index
    %c0_50 = arith.constant 0 : index
    %157 = vector.load %arg4[%c0_47, %c0_48, %c0_49, %c0_50] : memref<1x4x16x256xf32, #tpu.memory_space<vmem>>, vector<1x1x16x256xf32>
    %158 = vector.shape_cast %157 : vector<1x1x16x256xf32> to vector<16x256xf32>
    %159 = vector.shape_cast %156 : vector<16x256xf32> to vector<1x1x16x256xf32>
    tpu.vector_store %arg4[%c0_47, %c0_48, %c0_49, %c0_50], %159 {strides = array<i32>} : memref<1x4x16x256xf32, #tpu.memory_space<vmem>>, vector<1x1x16x256xf32>,
    %160 = vector.broadcast %116 : vector<16x1xf32> to vector<16x256xf32>
    %161 = arith.subf %53, %160 : vector<16x256xf32>
    %162 = vector.broadcast %144 : vector<16x1xf32> to vector<16x256xf32>
    %163 = arith.mulf %161, %162 : vector<16x256xf32>
    %cst_51 = arith.constant 0.000000e+00 : f32
    %164 = vector.broadcast %cst_51 : f32 to vector<16x256xf32>
    %165 = arith.subf %164, %163 : vector<16x256xf32>
    %166 = math.exp %165 : vector<16x256xf32>
    %cst_52 = arith.constant 1.000000e+00 : f32
    %167 = vector.broadcast %cst_52 : f32 to vector<16x256xf32>
    %168 = arith.addf %167, %166 : vector<16x256xf32>
    %cst_53 = arith.constant 1.000000e+00 : f32
    %169 = vector.broadcast %cst_53 : f32 to vector<16x256xf32>
    %170 = arith.divf %169, %168 : vector<16x256xf32>
    %171 = arith.mulf %163, %170 : vector<16x256xf32>
    %c0_54 = arith.constant 0 : index
    %c1_55 = arith.constant 1 : index
    %c0_56 = arith.constant 0 : index
    %c0_57 = arith.constant 0 : index
    %172 = vector.load %arg4[%c0_54, %c1_55, %c0_56, %c0_57] : memref<1x4x16x256xf32, #tpu.memory_space<vmem>>, vector<1x1x16x256xf32>
    %173 = vector.shape_cast %172 : vector<1x1x16x256xf32> to vector<16x256xf32>
    %174 = vector.shape_cast %171 : vector<16x256xf32> to vector<1x1x16x256xf32>
    tpu.vector_store %arg4[%c0_54, %c1_55, %c0_56, %c0_57], %174 {strides = array<i32>} : memref<1x4x16x256xf32, #tpu.memory_space<vmem>>, vector<1x1x16x256xf32>,
    %175 = vector.broadcast %116 : vector<16x1xf32> to vector<16x256xf32>
    %176 = arith.subf %78, %175 : vector<16x256xf32>
    %177 = vector.broadcast %144 : vector<16x1xf32> to vector<16x256xf32>
    %178 = arith.mulf %176, %177 : vector<16x256xf32>
    %cst_58 = arith.constant 0.000000e+00 : f32
    %179 = vector.broadcast %cst_58 : f32 to vector<16x256xf32>
    %180 = arith.subf %179, %178 : vector<16x256xf32>
    %181 = math.exp %180 : vector<16x256xf32>
    %cst_59 = arith.constant 1.000000e+00 : f32
    %182 = vector.broadcast %cst_59 : f32 to vector<16x256xf32>
    %183 = arith.addf %182, %181 : vector<16x256xf32>
    %cst_60 = arith.constant 1.000000e+00 : f32
    %184 = vector.broadcast %cst_60 : f32 to vector<16x256xf32>
    %185 = arith.divf %184, %183 : vector<16x256xf32>
    %186 = arith.mulf %178, %185 : vector<16x256xf32>
    %c0_61 = arith.constant 0 : index
    %c2_62 = arith.constant 2 : index
    %c0_63 = arith.constant 0 : index
    %c0_64 = arith.constant 0 : index
    %187 = vector.load %arg4[%c0_61, %c2_62, %c0_63, %c0_64] : memref<1x4x16x256xf32, #tpu.memory_space<vmem>>, vector<1x1x16x256xf32>
    %188 = vector.shape_cast %187 : vector<1x1x16x256xf32> to vector<16x256xf32>
    %189 = vector.shape_cast %186 : vector<16x256xf32> to vector<1x1x16x256xf32>
    tpu.vector_store %arg4[%c0_61, %c2_62, %c0_63, %c0_64], %189 {strides = array<i32>} : memref<1x4x16x256xf32, #tpu.memory_space<vmem>>, vector<1x1x16x256xf32>,
    %190 = vector.broadcast %116 : vector<16x1xf32> to vector<16x256xf32>
    %191 = arith.subf %103, %190 : vector<16x256xf32>
    %192 = vector.broadcast %144 : vector<16x1xf32> to vector<16x256xf32>
    %193 = arith.mulf %191, %192 : vector<16x256xf32>
    %cst_65 = arith.constant 0.000000e+00 : f32
    %194 = vector.broadcast %cst_65 : f32 to vector<16x256xf32>
    %195 = arith.subf %194, %193 : vector<16x256xf32>
    %196 = math.exp %195 : vector<16x256xf32>
    %cst_66 = arith.constant 1.000000e+00 : f32
    %197 = vector.broadcast %cst_66 : f32 to vector<16x256xf32>
    %198 = arith.addf %197, %196 : vector<16x256xf32>
    %cst_67 = arith.constant 1.000000e+00 : f32
    %199 = vector.broadcast %cst_67 : f32 to vector<16x256xf32>
    %200 = arith.divf %199, %198 : vector<16x256xf32>
    %201 = arith.mulf %193, %200 : vector<16x256xf32>
    %c0_68 = arith.constant 0 : index
    %c3_69 = arith.constant 3 : index
    %c0_70 = arith.constant 0 : index
    %c0_71 = arith.constant 0 : index
    %202 = vector.load %arg4[%c0_68, %c3_69, %c0_70, %c0_71] : memref<1x4x16x256xf32, #tpu.memory_space<vmem>>, vector<1x1x16x256xf32>
    %203 = vector.shape_cast %202 : vector<1x1x16x256xf32> to vector<16x256xf32>
    %204 = vector.shape_cast %201 : vector<16x256xf32> to vector<1x1x16x256xf32>
    tpu.vector_store %arg4[%c0_68, %c3_69, %c0_70, %c0_71], %204 {strides = array<i32>} : memref<1x4x16x256xf32, #tpu.memory_space<vmem>>, vector<1x1x16x256xf32>,
    return
  }
  func.func @transform_0(%arg0: i32) -> (i32, i32, i32) {
    %c0_i32 = arith.constant 0 : i32
    %c0_i32_0 = arith.constant 0 : i32
    %c0_i32_1 = arith.constant 0 : i32
    return %arg0, %c0_i32, %c0_i32_0 : i32, i32, i32
  }
  func.func @transform_1(%arg0: i32) -> (i32, i32) {
    %c0_i32 = arith.constant 0 : i32
    %c0_i32_0 = arith.constant 0 : i32
    %c0_i32_1 = arith.constant 0 : i32
    return %c0_i32, %c0_i32_0 : i32, i32
  }
  func.func @transform_2(%arg0: i32) -> (i32, i32) {
    %c0_i32 = arith.constant 0 : i32
    %c0_i32_0 = arith.constant 0 : i32
    %c0_i32_1 = arith.constant 0 : i32
    return %c0_i32, %c0_i32_0 : i32, i32
  }
  func.func @transform_3(%arg0: i32) -> (i32, i32, i32, i32) {
    %c0_i32 = arith.constant 0 : i32
    %c0_i32_0 = arith.constant 0 : i32
    %c0_i32_1 = arith.constant 0 : i32
    %c0_i32_2 = arith.constant 0 : i32
    return %arg0, %c0_i32, %c0_i32_0, %c0_i32_1 : i32, i32, i32, i32
  }
}

</mosaic_0001>

<llo_original>
// kernel: upsample_forward.1
$region0: #{upsample_forward.1}
  #allocation0 [shape = 'u32[]', space=smem, size = 0x4, offset = 0x4, fixed_abs, tag = 'smem constant byte address 0x4 - core index']
  #allocation1 [shape = 'u32[144,128]{1,0:T(1,128)}', space=vmem, size = 0x12000, scoped, tag = 'internal scratch']
  %s0 = inlined_call_operand.vmem [shape: f32[2,32,256], index: 0, kind: input, shape index: {}]
  %s1 = inlined_call_operand.vmem [shape: f32[256,32], index: 1, kind: input, shape index: {}]
  %s2 = inlined_call_operand.vmem [shape: f32[9,256], index: 2, kind: input, shape index: {}]
  %s3 = inlined_call_operand.vmem [shape: f32[2,4,16,256], index: 3, kind: output, shape index: {}]
  %s4 = sld [smem:[#allocation0]]
  $region45: #{upsample_forward.1} parent=0
    _
  %s6 = ssub.s32 1, %s4
  %s7 = scalar_select 0, %s6, %s4
  loop: start=0, step=1, limit=4
  $region2: #{upsample_forward.1} parent=0 // loop_pre_header
    _
  $region3: #{upsample_forward.1} parent=0 // loop_header
    %s9 = sphi 0, %s13
    %p10 = scmp.ge.s32.totalorder %s9, 4
    %s19 = sphi 0, %s21
    %s22 = sphi 0, %s19
    %s23 = sphi 0, %s22
    %s39 = sphi 0, %s23
    %s43 = sphi 0, %s43
    %s45 = sphi 0, %s43
    %s46 = sphi 0, %s45
    %s60 = sphi 0, %s46
    %s64 = sphi 0, %s64
    %s66 = sphi 0, %s64
    %s67 = sphi 0, %s66
    %s81 = sphi 0, %s67
    %s87 = sphi 0, %s89
    %s90 = sphi 0, %s87
    %s91 = sphi 0, %s90
    %s107 = sphi 0, %s91
  $region4: #{upsample_forward.1} parent=0 // loop_header_branch
    %12 = sbr.rel (%p10) target = $region8
  $region5: #{upsample_forward.1} parent=0 // loop_body
    %s14 = ssub.s32 %s9, 1
    %s15 = ssub.s32 %s9, 2
    %s16 = sadd.s32 %s9, 1
    %s17 = ssub.s32 %s9, %s16
    %p18 = scmp.eq.s32.totalorder %s17, 0
    %s20 = sadd.s32 %s19, 1
    %s21 = scalar_select %p18, %s19, %s20
    %p24 = pneg %p18
    %p25 = scmp.eq.s32.totalorder %s9, 1
    %p26 = por %p24, %p25
    %p27 = scmp.ne.s32.totalorder %s19, %s22
    %p28 = scmp.eq.s32.totalorder %s9, 0
    %p29 = por %p27, %p28
    %p30 = scmp.ne.s32.totalorder %s19, %s22
    %p31 = scmp.eq.s32.totalorder %s14, 1
    %p32 = por %p30, %p31
    %p33 = scmp.ne.s32.totalorder %s22, %s23
    %p34 = scmp.eq.s32.totalorder %s14, 0
    %p35 = por %p33, %p34
    %p36 = scmp.ne.s32.totalorder %s22, %s23
    %p37 = scmp.eq.s32.totalorder %s15, 1
    %p38 = por %p36, %p37
    %p40 = scmp.ne.s32.totalorder %s23, %s39
    %p41 = scmp.eq.s32.totalorder %s15, 0
    %p42 = por %p40, %p41
    %s44 = sadd.s32 %s43, 1
    %p47 = scmp.eq.s32.totalorder %s9, 1
    %p48 = scmp.ne.s32.totalorder %s43, %s45
    %p49 = scmp.eq.s32.totalorder %s9, 0
    %p50 = por %p48, %p49
    %p51 = scmp.ne.s32.totalorder %s43, %s45
    %p52 = scmp.eq.s32.totalorder %s14, 1
    %p53 = por %p51, %p52
    %p54 = scmp.ne.s32.totalorder %s45, %s46
    %p55 = scmp.eq.s32.totalorder %s14, 0
    %p56 = por %p54, %p55
    %p57 = scmp.ne.s32.totalorder %s45, %s46
    %p58 = scmp.eq.s32.totalorder %s15, 1
    %p59 = por %p57, %p58
    %p61 = scmp.ne.s32.totalorder %s46, %s60
    %p62 = scmp.eq.s32.totalorder %s15, 0
    %p63 = por %p61, %p62
    %s65 = sadd.s32 %s64, 1
    %p68 = scmp.eq.s32.totalorder %s9, 1
    %p69 = scmp.ne.s32.totalorder %s64, %s66
    %p70 = scmp.eq.s32.totalorder %s9, 0
    %p71 = por %p69, %p70
    %p72 = scmp.ne.s32.totalorder %s64, %s66
    %p73 = scmp.eq.s32.totalorder %s14, 1
    %p74 = por %p72, %p73
    %p75 = scmp.ne.s32.totalorder %s66, %s67
    %p76 = scmp.eq.s32.totalorder %s14, 0
    %p77 = por %p75, %p76
    %p78 = scmp.ne.s32.totalorder %s66, %s67
    %p79 = scmp.eq.s32.totalorder %s15, 1
    %p80 = por %p78, %p79
    %p82 = scmp.ne.s32.totalorder %s67, %s81
    %p83 = scmp.eq.s32.totalorder %s15, 0
    %p84 = por %p82, %p83
    %s85 = ssub.s32 %s9, %s16
    %p86 = scmp.eq.s32.totalorder %s85, 0
    %s88 = sadd.s32 %s87, 1
    %s89 = scalar_select %p86, %s87, %s88
    %p92 = pneg %p86
    %p93 = scmp.eq.s32.totalorder %s9, 1
    %p94 = por %p92, %p93
    %p95 = scmp.ne.s32.totalorder %s87, %s90
    %p96 = scmp.eq.s32.totalorder %s9, 0
    %p97 = por %p95, %p96
    %p98 = scmp.ne.s32.totalorder %s87, %s90
    %p99 = scmp.eq.s32.totalorder %s14, 1
    %p100 = por %p98, %p99
    %p101 = scmp.ne.s32.totalorder %s90, %s91
    %p102 = scmp.eq.s32.totalorder %s14, 0
    %p103 = por %p101, %p102
    %p104 = scmp.ne.s32.totalorder %s90, %s91
    %p105 = scmp.eq.s32.totalorder %s15, 1
    %p106 = por %p104, %p105
    %p108 = scmp.ne.s32.totalorder %s91, %s107
    %p109 = scmp.eq.s32.totalorder %s15, 0
    %p110 = por %p108, %p109
    %p111 = scmp.le.s32.totalorder 1, %s9
    %p112 = scmp.lt.s32.totalorder %s9, 3
    %p113 = pnand %p111, %p112
    %p114 = pneg %p113
    // Predicated region
    $region9: #{upsample_forward.1} parent=5 // pred_check
      _
    $region10: #{upsample_forward.1} parent=5 // pred_check_branch
      %116 = sbr.rel (%p113) target = $region12
    $region11: #{upsample_forward.1} parent=5 // pred_region
      %s117 = ssub.s32 %s9, 1
      // Predicated region
      $region13: #{upsample_forward.1} parent=11 // pred_check
        %p118 = pneg %p56
      $region14: #{upsample_forward.1} parent=11 // pred_check_branch
        %120 = sbr.rel (%p118) target = $region16
      $region15: #{upsample_forward.1} parent=11 // pred_region
        _
      $region16: #{upsample_forward.1} parent=11 // pred_fallthru
        _
      // Predicated region
      $region17: #{upsample_forward.1} parent=11 // pred_check
        %p121 = pneg %p77
      $region18: #{upsample_forward.1} parent=11 // pred_check_branch
        %123 = sbr.rel (%p121) target = $region20
      $region19: #{upsample_forward.1} parent=11 // pred_region
        _
      $region20: #{upsample_forward.1} parent=11 // pred_fallthru
        _
    $region12: #{upsample_forward.1} parent=5 // pred_fallthru
      _
    %p124 = scmp.lt.s32.totalorder %s9, 2
    // Predicated region
    $region21: #{upsample_forward.1} parent=5 // pred_check
      %p125 = pneg %p124
    $region22: #{upsample_forward.1} parent=5 // pred_check_branch
      %127 = sbr.rel (%p125) target = $region24
    $region23: #{upsample_forward.1} parent=5 // pred_region
      // Predicated region
      $region25: #{upsample_forward.1} parent=23 // pred_check
        %p128 = pneg %p29
      $region26: #{upsample_forward.1} parent=23 // pred_check_branch
        %130 = sbr.rel (%p128) target = $region28
      $region27: #{upsample_forward.1} parent=23 // pred_region
        %p131 = scmp.lt.s32.totalorder %s9, 1
        %s132 = scalar_select %p131, %s9, 1
        %s133 = smul.addr %s132, 8
        %s134 = smul.addr %s133, 8
        %s135 = scalar_lea.vmem %s0, %s134
      $region28: #{upsample_forward.1} parent=23 // pred_fallthru
        _
    $region24: #{upsample_forward.1} parent=5 // pred_fallthru
      _
    %p136 = scmp.le.s32.totalorder 1, %s9
    %p137 = scmp.lt.s32.totalorder %s9, 3
    %p138 = pnand %p136, %p137
    %p139 = pneg %p138
    // Predicated region
    $region29: #{upsample_forward.1} parent=5 // pred_check
      _
    $region30: #{upsample_forward.1} parent=5 // pred_check_branch
      %141 = sbr.rel (%p138) target = $region32
    $region31: #{upsample_forward.1} parent=5 // pred_region
      %s142 = ssub.s32 %s9, 1
      %p143 = scmp.lt.s32.totalorder %s14, 1
      %s144 = scalar_select %p143, %s14, 1
      %s145 = smul.addr %s144, 8
      %s146 = smul.addr %s145, 8
      %s147 = scalar_lea.vmem %s0, %s146
      %p148 = pneg %p35
      %p149 = pneg %p32
      %p150 = pneg %p56
      %p151 = pneg %p53
      %p152 = pneg %p77
      %p153 = pneg %p74
      %p154 = pneg %p103
      %p155 = pneg %p100
      %p156 = scmp.lt.s32.totalorder %s14, 1
      %s157 = scalar_select %p156, %s14, 1
      %s158 = smul.addr %s157, 16
      %s159 = smul.addr %s158, 8
      %s160 = scalar_lea.vmem %s3, %s159
      %p161 = scmp.lt.s32.totalorder %s14, 1
      %s162 = scalar_select %p161, %s14, 1
      %s163 = smul.addr %s162, 8
      %s164 = smul.addr %s163, 8
      %s165 = scalar_lea.vmem %s0, %s164
      %p166 = scmp.lt.s32.totalorder %s14, 1
      %s167 = scalar_select %p166, %s14, 1
      %s168 = smul.addr %s167, 16
      %s169 = smul.addr %s168, 8
      %s170 = scalar_lea.vmem %s3, %s169
      %v171 = vld [vmem:[%s1] sm:$0xff]
      %v172 = vld [vmem:[%s1 + $0x8] sm:$0xff]
      %v173 = vld [vmem:[%s1 + $0x10] sm:$0xff]
      %v174 = vld [vmem:[%s1 + $0x18] sm:$0xff]
      %v175 = vld [vmem:[%s1 + $0x20] sm:$0xff]
      %v176 = vld [vmem:[%s1 + $0x28] sm:$0xff]
      %v177 = vld [vmem:[%s1 + $0x30] sm:$0xff]
      %v178 = vld [vmem:[%s1 + $0x38] sm:$0xff]
      %v179 = vld [vmem:[%s1 + $0x40] sm:$0xff]
      %v180 = vld [vmem:[%s1 + $0x48] sm:$0xff]
      %v181 = vld [vmem:[%s1 + $0x50] sm:$0xff]
      %v182 = vld [vmem:[%s1 + $0x58] sm:$0xff]
      %v183 = vld [vmem:[%s1 + $0x60] sm:$0xff]
      %v184 = vld [vmem:[%s1 + $0x68] sm:$0xff]
      %v185 = vld [vmem:[%s1 + $0x70] sm:$0xff]
      %v186 = vld [vmem:[%s1 + $0x78] sm:$0xff]
      %v187 = vld [vmem:[%s1 + $0x80] sm:$0xff]
      %v188 = vld [vmem:[%s1 + $0x88] sm:$0xff]
      %v189 = vld [vmem:[%s1 + $0x90] sm:$0xff]
      %v190 = vld [vmem:[%s1 + $0x98] sm:$0xff]
      %v191 = vld [vmem:[%s1 + $0xa0] sm:$0xff]
      %v192 = vld [vmem:[%s1 + $0xa8] sm:$0xff]
      %v193 = vld [vmem:[%s1 + $0xb0] sm:$0xff]
      %v194 = vld [vmem:[%s1 + $0xb8] sm:$0xff]
      %v195 = vld [vmem:[%s1 + $0xc0] sm:$0xff]
      %v196 = vld [vmem:[%s1 + $0xc8] sm:$0xff]
      %v197 = vld [vmem:[%s1 + $0xd0] sm:$0xff]
      %v198 = vld [vmem:[%s1 + $0xd8] sm:$0xff]
      %v199 = vld [vmem:[%s1 + $0xe0] sm:$0xff]
      %v200 = vld [vmem:[%s1 + $0xe8] sm:$0xff]
      %v201 = vld [vmem:[%s1 + $0xf0] sm:$0xff]
      %v202 = vld [vmem:[%s1 + $0xf8] sm:$0xff]
      %v203 = vld [vmem:[%s165] sm:$0xff]
      %v204 = vld [vmem:[%s165 + $0x8] sm:$0xff]
      %v205 = vld [vmem:[%s165 + $0x10] sm:$0xff]
      %v206 = vld [vmem:[%s165 + $0x18] sm:$0xff]
      %v207 = vld [vmem:[%s165 + $0x20] sm:$0xff]
      %v208 = vld [vmem:[%s165 + $0x28] sm:$0xff]
      %v209 = vld [vmem:[%s165 + $0x30] sm:$0xff]
      %v210 = vld [vmem:[%s165 + $0x38] sm:$0xff]
      %vm211 = vcmask 261120
      %v213 = vsel %vm211, %v171, 0
      %v216 = vsel %vm211, %v172, 0
      %v219 = vsel %vm211, %v173, 0
      %v222 = vsel %vm211, %v174, 0
      %v225 = vsel %vm211, %v175, 0
      %v228 = vsel %vm211, %v176, 0
      %v231 = vsel %vm211, %v177, 0
      %v234 = vsel %vm211, %v178, 0
      %v237 = vsel %vm211, %v179, 0
      %v240 = vsel %vm211, %v180, 0
      %v243 = vsel %vm211, %v181, 0
      %v246 = vsel %vm211, %v182, 0
      %v249 = vsel %vm211, %v183, 0
      %v252 = vsel %vm211, %v184, 0
      %v255 = vsel %vm211, %v185, 0
      %v258 = vsel %vm211, %v186, 0
      %v261 = vsel %vm211, %v187, 0
      %v264 = vsel %vm211, %v188, 0
      %v267 = vsel %vm211, %v189, 0
      %v270 = vsel %vm211, %v190, 0
      %v273 = vsel %vm211, %v191, 0
      %v276 = vsel %vm211, %v192, 0
      %v279 = vsel %vm211, %v193, 0
      %v282 = vsel %vm211, %v194, 0
      %v285 = vsel %vm211, %v195, 0
      %v288 = vsel %vm211, %v196, 0
      %v291 = vsel %vm211, %v197, 0
      %v294 = vsel %vm211, %v198, 0
      %v297 = vsel %vm211, %v199, 0
      %v300 = vsel %vm211, %v200, 0
      %v303 = vsel %vm211, %v201, 0
      %v306 = vsel %vm211, %v202, 0
      %308 = vmatprep.subr.mxu0 0.0
      %309 = vmatpush1.msra.mxu0 0.0
      %310 = vmatprep.subr.mxu0 0.0
      %311 = vmatpush1.msra.mxu0 0.0
      %312 = vmatprep.subr.mxu0 0.0
      %313 = vmatpush1.msra.mxu0 0.0
      %314 = vmatprep.subr.mxu0 0.0
      %315 = vmatpush1.msra.mxu0 0.0
      %316 = vmatprep.subr.mxu0 0.0
      %317 = vmatpush1.msra.mxu0 0.0
      %318 = vmatprep.subr.mxu0 0.0
      %319 = vmatpush1.msra.mxu0 0.0
      %320 = vmatprep.subr.mxu0 0.0
      %321 = vmatpush1.msra.mxu0 0.0
      %322 = vmatprep.subr.mxu0 0.0
      %323 = vmatpush1.msra.mxu0 0.0
      %324 = vmatprep.subr.mxu0 0.0
      %325 = vmatpush1.msra.mxu0 0.0
      %326 = vmatprep.subr.mxu0 0.0
      %327 = vmatpush1.msra.mxu0 0.0
      %328 = vmatprep.subr.mxu0 0.0
      %329 = vmatpush1.msra.mxu0 0.0
      %330 = vmatprep.subr.mxu0 0.0
      %331 = vmatpush1.msra.mxu0 0.0
      %332 = vmatprep.subr.mxu0 %v210
      %333 = vmatpush1.msra.mxu0 %v209
      %334 = vmatprep.subr.mxu0 %v208
      %335 = vmatpush1.msra.mxu0 %v207
      %336 = vmatprep.subr.mxu0 %v206
      %337 = vmatpush1.msra.mxu0 %v205
      %338 = vmatprep.subr.mxu0 %v204
      %339 = vmatpush1.msra.mxu0 %v203
      %340 = vmatprep.subr.mxu0 0.0
      %341 = vmatpush2.msra.mxu0 0.0
      %342 = vmatprep.subr.mxu0 0.0
      %343 = vmatpush2.msra.mxu0 0.0
      %344 = vmatprep.subr.mxu0 0.0
      %345 = vmatpush2.msra.mxu0 0.0
      %346 = vmatprep.subr.mxu0 0.0
      %347 = vmatpush2.msra.mxu0 0.0
      %348 = vmatprep.subr.mxu0 0.0
      %349 = vmatpush2.msra.mxu0 0.0
      %350 = vmatprep.subr.mxu0 0.0
      %351 = vmatpush2.msra.mxu0 0.0
      %352 = vmatprep.subr.mxu0 0.0
      %353 = vmatpush2.msra.mxu0 0.0
      %354 = vmatprep.subr.mxu0 0.0
      %355 = vmatpush2.msra.mxu0 0.0
      %356 = vmatprep.subr.mxu0 0.0
      %357 = vmatpush2.msra.mxu0 0.0
      %358 = vmatprep.subr.mxu0 0.0
      %359 = vmatpush2.msra.mxu0 0.0
      %360 = vmatprep.subr.mxu0 0.0
      %361 = vmatpush2.msra.mxu0 0.0
      %362 = vmatprep.subr.mxu0 0.0
      %363 = vmatpush2.msra.mxu0 0.0
      %364 = vmatprep.subr.mxu0 0.0
      %365 = vmatpush2.msra.mxu0 0.0
      %366 = vmatprep.subr.mxu0 0.0
      %367 = vmatpush2.msra.mxu0 0.0
      %368 = vmatprep.subr.mxu0 0.0
      %369 = vmatpush2.msra.mxu0 0.0
      %370 = vmatprep.subr.mxu0 0.0
      %371 = vmatpush2.msra.mxu0 0.0
      %372 = vmatprep.mubr.f32.mxu0 0.0
      %373 = vmatmul.mubr.f32.gmra.mxu0 %v213
      %v374 = vpop.f32.mrf.mxu0
      %v375 = vadd.f32 0.0, %v374
      %v376 = vpop.f32.mrf.mxu0
      %v377 = vadd.f32 0.0, %v376
      %378 = vmatprep.mubr.f32.mxu0 0.0
      %379 = vmatmul.mubr.f32.gmra.mxu0 %v216
      %v380 = vpop.f32.mrf.mxu0
      %v381 = vadd.f32 0.0, %v380
      %v382 = vpop.f32.mrf.mxu0
      %v383 = vadd.f32 0.0, %v382
      %384 = vmatprep.mubr.f32.mxu0 0.0
      %385 = vmatmul.mubr.f32.gmra.mxu0 %v219
      %v386 = vpop.f32.mrf.mxu0
      %v387 = vadd.f32 0.0, %v386
      %v388 = vpop.f32.mrf.mxu0
      %v389 = vadd.f32 0.0, %v388
      %390 = vmatprep.mubr.f32.mxu0 0.0
      %391 = vmatmul.mubr.f32.gmra.mxu0 %v222
      %v392 = vpop.f32.mrf.mxu0
      %v393 = vadd.f32 0.0, %v392
      %v394 = vpop.f32.mrf.mxu0
      %v395 = vadd.f32 0.0, %v394
      %396 = vmatprep.mubr.f32.mxu0 0.0
      %397 = vmatmul.mubr.f32.gmra.mxu0 %v225
      %v398 = vpop.f32.mrf.mxu0
      %v399 = vadd.f32 0.0, %v398
      %v400 = vpop.f32.mrf.mxu0
      %v401 = vadd.f32 0.0, %v400
      %402 = vmatprep.mubr.f32.mxu0 0.0
      %403 = vmatmul.mubr.f32.gmra.mxu0 %v228
      %v404 = vpop.f32.mrf.mxu0
      %v405 = vadd.f32 0.0, %v404
      %v406 = vpop.f32.mrf.mxu0
      %v407 = vadd.f32 0.0, %v406
      %408 = vmatprep.mubr.f32.mxu0 0.0
      %409 = vmatmul.mubr.f32.gmra.mxu0 %v231
      %v410 = vpop.f32.mrf.mxu0
      %v411 = vadd.f32 0.0, %v410
      %v412 = vpop.f32.mrf.mxu0
      %v413 = vadd.f32 0.0, %v412
      %414 = vmatprep.mubr.f32.mxu0 0.0
      %415 = vmatmul.mubr.f32.gmra.mxu0 %v234
      %v416 = vpop.f32.mrf.mxu0
      %v417 = vadd.f32 0.0, %v416
      %v418 = vpop.f32.mrf.mxu0
      %v419 = vadd.f32 0.0, %v418
      %420 = vmatprep.mubr.f32.mxu0 0.0
      %421 = vmatmul.mubr.f32.gmra.mxu0 %v237
      %v422 = vpop.f32.mrf.mxu0
      %v423 = vadd.f32 0.0, %v422
      %v424 = vpop.f32.mrf.mxu0
      %v425 = vadd.f32 0.0, %v424
      %426 = vmatprep.mubr.f32.mxu0 0.0
      %427 = vmatmul.mubr.f32.gmra.mxu0 %v240
      %v428 = vpop.f32.mrf.mxu0
      %v429 = vadd.f32 0.0, %v428
      %v430 = vpop.f32.mrf.mxu0
      %v431 = vadd.f32 0.0, %v430
      %432 = vmatprep.mubr.f32.mxu0 0.0
      %433 = vmatmul.mubr.f32.gmra.mxu0 %v243
      %v434 = vpop.f32.mrf.mxu0
      %v435 = vadd.f32 0.0, %v434
      %v436 = vpop.f32.mrf.mxu0
      %v437 = vadd.f32 0.0, %v436
      %438 = vmatprep.mubr.f32.mxu0 0.0
      %439 = vmatmul.mubr.f32.gmra.mxu0 %v246
      %v440 = vpop.f32.mrf.mxu0
      %v441 = vadd.f32 0.0, %v440
      %v442 = vpop.f32.mrf.mxu0
      %v443 = vadd.f32 0.0, %v442
      %444 = vmatprep.mubr.f32.mxu0 0.0
      %445 = vmatmul.mubr.f32.gmra.mxu0 %v249
      %v446 = vpop.f32.mrf.mxu0
      %v447 = vadd.f32 0.0, %v446
      %v448 = vpop.f32.mrf.mxu0
      %v449 = vadd.f32 0.0, %v448
      %450 = vmatprep.mubr.f32.mxu0 0.0
      %451 = vmatmul.mubr.f32.gmra.mxu0 %v252
      %v452 = vpop.f32.mrf.mxu0
      %v453 = vadd.f32 0.0, %v452
      %v454 = vpop.f32.mrf.mxu0
      %v455 = vadd.f32 0.0, %v454
      %456 = vmatprep.mubr.f32.mxu0 0.0
      %457 = vmatmul.mubr.f32.gmra.mxu0 %v255
      %v458 = vpop.f32.mrf.mxu0
      %v459 = vadd.f32 0.0, %v458
      %v460 = vpop.f32.mrf.mxu0
      %v461 = vadd.f32 0.0, %v460
      %462 = vmatprep.mubr.f32.mxu0 0.0
      %463 = vmatmul.mubr.f32.gmra.mxu0 %v258
      %v464 = vpop.f32.mrf.mxu0
      %v465 = vadd.f32 0.0, %v464
      %v466 = vpop.f32.mrf.mxu0
      %v467 = vadd.f32 0.0, %v466
      %468 = vmatprep.mubr.f32.mxu0 0.0
      %469 = vmatmul.mubr.f32.gmra.mxu0 %v261
      %v470 = vpop.f32.mrf.mxu0
      %v471 = vadd.f32 0.0, %v470
      %v472 = vpop.f32.mrf.mxu0
      %v473 = vadd.f32 0.0, %v472
      %474 = vmatprep.mubr.f32.mxu0 0.0
      %475 = vmatmul.mubr.f32.gmra.mxu0 %v264
      %v476 = vpop.f32.mrf.mxu0
      %v477 = vadd.f32 0.0, %v476
      %v478 = vpop.f32.mrf.mxu0
      %v479 = vadd.f32 0.0, %v478
      %480 = vmatprep.mubr.f32.mxu0 0.0
      %481 = vmatmul.mubr.f32.gmra.mxu0 %v267
      %v482 = vpop.f32.mrf.mxu0
      %v483 = vadd.f32 0.0, %v482
      %v484 = vpop.f32.mrf.mxu0
      %v485 = vadd.f32 0.0, %v484
      %486 = vmatprep.mubr.f32.mxu0 0.0
      %487 = vmatmul.mubr.f32.gmra.mxu0 %v270
      %v488 = vpop.f32.mrf.mxu0
      %v489 = vadd.f32 0.0, %v488
      %v490 = vpop.f32.mrf.mxu0
      %v491 = vadd.f32 0.0, %v490
      %492 = vmatprep.mubr.f32.mxu0 0.0
      %493 = vmatmul.mubr.f32.gmra.mxu0 %v273
      %v494 = vpop.f32.mrf.mxu0
      %v495 = vadd.f32 0.0, %v494
      %v496 = vpop.f32.mrf.mxu0
      %v497 = vadd.f32 0.0, %v496
      %498 = vmatprep.mubr.f32.mxu0 0.0
      %499 = vmatmul.mubr.f32.gmra.mxu0 %v276
      %v500 = vpop.f32.mrf.mxu0
      %v501 = vadd.f32 0.0, %v500
      %v502 = vpop.f32.mrf.mxu0
      %v503 = vadd.f32 0.0, %v502
      %504 = vmatprep.mubr.f32.mxu0 0.0
      %505 = vmatmul.mubr.f32.gmra.mxu0 %v279
      %v506 = vpop.f32.mrf.mxu0
      %v507 = vadd.f32 0.0, %v506
      %v508 = vpop.f32.mrf.mxu0
      %v509 = vadd.f32 0.0, %v508
      %510 = vmatprep.mubr.f32.mxu0 0.0
      %511 = vmatmul.mubr.f32.gmra.mxu0 %v282
      %v512 = vpop.f32.mrf.mxu0
      %v513 = vadd.f32 0.0, %v512
      %v514 = vpop.f32.mrf.mxu0
      %v515 = vadd.f32 0.0, %v514
      %516 = vmatprep.mubr.f32.mxu0 0.0
      %517 = vmatmul.mubr.f32.gmra.mxu0 %v285
      %v518 = vpop.f32.mrf.mxu0
      %v519 = vadd.f32 0.0, %v518
      %v520 = vpop.f32.mrf.mxu0
      %v521 = vadd.f32 0.0, %v520
      %522 = vmatprep.mubr.f32.mxu0 0.0
      %523 = vmatmul.mubr.f32.gmra.mxu0 %v288
      %v524 = vpop.f32.mrf.mxu0
      %v525 = vadd.f32 0.0, %v524
      %v526 = vpop.f32.mrf.mxu0
      %v527 = vadd.f32 0.0, %v526
      %528 = vmatprep.mubr.f32.mxu0 0.0
      %529 = vmatmul.mubr.f32.gmra.mxu0 %v291
      %v530 = vpop.f32.mrf.mxu0
      %v531 = vadd.f32 0.0, %v530
      %v532 = vpop.f32.mrf.mxu0
      %v533 = vadd.f32 0.0, %v532
      %534 = vmatprep.mubr.f32.mxu0 0.0
      %535 = vmatmul.mubr.f32.gmra.mxu0 %v294
      %v536 = vpop.f32.mrf.mxu0
      %v537 = vadd.f32 0.0, %v536
      %v538 = vpop.f32.mrf.mxu0
      %v539 = vadd.f32 0.0, %v538
      %540 = vmatprep.mubr.f32.mxu0 0.0
      %541 = vmatmul.mubr.f32.gmra.mxu0 %v297
      %v542 = vpop.f32.mrf.mxu0
      %v543 = vadd.f32 0.0, %v542
      %v544 = vpop.f32.mrf.mxu0
      %v545 = vadd.f32 0.0, %v544
      %546 = vmatprep.mubr.f32.mxu0 0.0
      %547 = vmatmul.mubr.f32.gmra.mxu0 %v300
      %v548 = vpop.f32.mrf.mxu0
      %v549 = vadd.f32 0.0, %v548
      %v550 = vpop.f32.mrf.mxu0
      %v551 = vadd.f32 0.0, %v550
      %552 = vmatprep.mubr.f32.mxu0 0.0
      %553 = vmatmul.mubr.f32.gmra.mxu0 %v303
      %v554 = vpop.f32.mrf.mxu0
      %v555 = vadd.f32 0.0, %v554
      %v556 = vpop.f32.mrf.mxu0
      %v557 = vadd.f32 0.0, %v556
      %558 = vmatprep.mubr.f32.mxu0 0.0
      %559 = vmatmul.mubr.f32.gmra.mxu0 %v306
      %v560 = vpop.f32.mrf.mxu0
      %v561 = vadd.f32 0.0, %v560
      %v562 = vpop.f32.mrf.mxu0
      %v563 = vadd.f32 0.0, %v562
      %564 = vdwg.mxu0
      %569 = vrot.lane.b32.xlu0 %v375, 17
      %v570 = vpop.permute.xlu0 %569
      %571 = vrot.lane.b32.xlu0 %v377, 17
      %v572 = vpop.permute.xlu0 %571
      %573 = vrot.lane.b32.xlu0 %v381, 17
      %v574 = vpop.permute.xlu0 %573
      %575 = vrot.lane.b32.xlu0 %v383, 17
      %v576 = vpop.permute.xlu0 %575
      %vm577 = vcmask 138240
      %v578 = vsel %vm577, %v570, %v572
      %v579 = vsel %vm577, %v574, %v576
      %v584 = vsel %vm577, 0.0, %v570
      %v585 = vsel %vm577, 0.0, %v574
      %v586 = vld [vmem:[%s2] ss:$8 sm:$0x3]
      %v588 = vlaneseq
      %v589 = vshrl.u32 %v588, 7
      %v590 = vsub.s32 0, %v589
      %v591 = vrot.slane %v586, %v590
      %v592 = vlaneseq
      %v593 = vshrl.u32 %v592, 7
      %v594 = vsub.s32 1, %v593
      %v595 = vrot.slane %v586, %v594
      %v598 = vmul.f32 %v584, %v591
      %v599 = vmul.f32 %v578, %v595
      %v600 = vmul.f32 %v585, %v591
      %v601 = vmul.f32 %v579, %v595
      %606 = vrot.lane.b32.xlu0 %v387, 16
      %v607 = vpop.permute.xlu0 %606
      %608 = vrot.lane.b32.xlu0 %v389, 16
      %v609 = vpop.permute.xlu0 %608
      %610 = vrot.lane.b32.xlu0 %v393, 16
      %v611 = vpop.permute.xlu0 %610
      %612 = vrot.lane.b32.xlu0 %v395, 16
      %v613 = vpop.permute.xlu0 %612
      %vm614 = vcmask 130048
      %v615 = vsel %vm614, %v607, %v609
      %v616 = vsel %vm614, %v611, %v613
      %v621 = vsel %vm614, 0.0, %v607
      %v622 = vsel %vm614, 0.0, %v611
      %s623 = scalar_lea.vmem %s2, 1
      %v624 = vld [vmem:[%s623] ss:$8 sm:$0x3]
      %v626 = vlaneseq
      %v627 = vshrl.u32 %v626, 7
      %v628 = vsub.s32 0, %v627
      %v629 = vrot.slane %v624, %v628
      %v630 = vlaneseq
      %v631 = vshrl.u32 %v630, 7
      %v632 = vsub.s32 1, %v631
      %v633 = vrot.slane %v624, %v632
      %v636 = vmul.f32 %v621, %v629
      %v637 = vmul.f32 %v615, %v633
      %v638 = vmul.f32 %v622, %v629
      %v639 = vmul.f32 %v616, %v633
      %v640 = vadd.f32 %v598, %v636
      %v641 = vadd.f32 %v599, %v637
      %v642 = vadd.f32 %v600, %v638
      %v643 = vadd.f32 %v601, %v639
      %648 = vrot.lane.b32.xlu0 %v399, 1
      %v649 = vpop.permute.xlu0 %648
      %650 = vrot.lane.b32.xlu0 %v401, 1
      %v651 = vpop.permute.xlu0 %650
      %652 = vrot.lane.b32.xlu0 %v405, 1
      %v653 = vpop.permute.xlu0 %652
      %654 = vrot.lane.b32.xlu0 %v407, 1
      %v655 = vpop.permute.xlu0 %654
      %vm656 = vcmask 7168
      %v657 = vsel %vm656, %v649, %v651
      %v658 = vsel %vm656, %v653, %v655
      %v663 = vsel %vm656, 0.0, %v649
      %v664 = vsel %vm656, 0.0, %v653
      %s665 = scalar_lea.vmem %s2, 3
      %v666 = vld [vmem:[%s665] ss:$8 sm:$0x3]
      %v668 = vlaneseq
      %v669 = vshrl.u32 %v668, 7
      %v670 = vsub.s32 0, %v669
      %v671 = vrot.slane %v666, %v670
      %v672 = vlaneseq
      %v673 = vshrl.u32 %v672, 7
      %v674 = vsub.s32 1, %v673
      %v675 = vrot.slane %v666, %v674
      %v678 = vmul.f32 %v663, %v671
      %v679 = vmul.f32 %v657, %v675
      %v680 = vmul.f32 %v664, %v671
      %v681 = vmul.f32 %v658, %v675
      %v682 = vadd.f32 %v640, %v678
      %v683 = vadd.f32 %v641, %v679
      %v684 = vadd.f32 %v642, %v680
      %v685 = vadd.f32 %v643, %v681
      %v686 = vadd.f32 %v682, %v411
      %v687 = vadd.f32 %v683, %v413
      %v688 = vadd.f32 %v684, %v417
      %v689 = vadd.f32 %v685, %v419
      %694 = vrot.lane.b32.xlu0 %v423, 16
      %v695 = vpop.permute.xlu0 %694
      %696 = vrot.lane.b32.xlu0 %v425, 16
      %v697 = vpop.permute.xlu0 %696
      %698 = vrot.lane.b32.xlu0 %v429, 16
      %v699 = vpop.permute.xlu0 %698
      %700 = vrot.lane.b32.xlu0 %v431, 16
      %v701 = vpop.permute.xlu0 %700
      %v702 = vsel %vm614, %v695, %v697
      %v703 = vsel %vm614, %v699, %v701
      %v708 = vsel %vm614, 0.0, %v695
      %v709 = vsel %vm614, 0.0, %v699
      %v710 = vmul.f32 %v708, %v629
      %v711 = vmul.f32 %v702, %v633
      %v712 = vmul.f32 %v709, %v629
      %v713 = vmul.f32 %v703, %v633
      %718 = vrot.lane.b32.xlu0 %v435, 15
      %v719 = vpop.permute.xlu0 %718
      %720 = vrot.lane.b32.xlu0 %v437, 15
      %v721 = vpop.permute.xlu0 %720
      %722 = vrot.lane.b32.xlu0 %v441, 15
      %v723 = vpop.permute.xlu0 %722
      %724 = vrot.lane.b32.xlu0 %v443, 15
      %v725 = vpop.permute.xlu0 %724
      %vm726 = vcmask 121856
      %v727 = vsel %vm726, %v719, %v721
      %v728 = vsel %vm726, %v723, %v725
      %v733 = vsel %vm726, 0.0, %v719
      %v734 = vsel %vm726, 0.0, %v723
      %s735 = scalar_lea.vmem %s2, 2
      %v736 = vld [vmem:[%s735] ss:$8 sm:$0x3]
      %v738 = vlaneseq
      %v739 = vshrl.u32 %v738, 7
      %v740 = vsub.s32 0, %v739
      %v741 = vrot.slane %v736, %v740
      %v742 = vlaneseq
      %v743 = vshrl.u32 %v742, 7
      %v744 = vsub.s32 1, %v743
      %v745 = vrot.slane %v736, %v744
      %v748 = vmul.f32 %v733, %v741
      %v749 = vmul.f32 %v727, %v745
      %v750 = vmul.f32 %v734, %v741
      %v751 = vmul.f32 %v728, %v745
      %v752 = vadd.f32 %v710, %v748
      %v753 = vadd.f32 %v711, %v749
      %v754 = vadd.f32 %v712, %v750
      %v755 = vadd.f32 %v713, %v751
      %v756 = vadd.f32 %v752, %v447
      %v757 = vadd.f32 %v753, %v449
      %v758 = vadd.f32 %v754, %v453
      %v759 = vadd.f32 %v755, %v455
      %764 = vrot.lane.b32.xlu0 %v459, 127
      %v765 = vpop.permute.xlu0 %764
      %766 = vrot.lane.b32.xlu0 %v461, 127
      %v767 = vpop.permute.xlu0 %766
      %768 = vrot.lane.b32.xlu0 %v465, 127
      %v769 = vpop.permute.xlu0 %768
      %770 = vrot.lane.b32.xlu0 %v467, 127
      %v771 = vpop.permute.xlu0 %770
      %vm772 = vcmask 1039360
      %v773 = vsel %vm772, %v765, %v767
      %v774 = vsel %vm772, %v769, %v771
      %v779 = vsel %vm772, %v767, 0.0
      %v780 = vsel %vm772, %v771, 0.0
      %s781 = scalar_lea.vmem %s2, 5
      %v782 = vld [vmem:[%s781] ss:$8 sm:$0x3]
      %v784 = vlaneseq
      %v785 = vshrl.u32 %v784, 7
      %v786 = vsub.s32 0, %v785
      %v787 = vrot.slane %v782, %v786
      %v788 = vlaneseq
      %v789 = vshrl.u32 %v788, 7
      %v790 = vsub.s32 1, %v789
      %v791 = vrot.slane %v782, %v790
      %v794 = vmul.f32 %v773, %v787
      %v795 = vmul.f32 %v779, %v791
      %v796 = vmul.f32 %v774, %v787
      %v797 = vmul.f32 %v780, %v791
      %v798 = vadd.f32 %v756, %v794
      %v799 = vadd.f32 %v757, %v795
      %v800 = vadd.f32 %v758, %v796
      %v801 = vadd.f32 %v759, %v797
      %806 = vrot.lane.b32.xlu0 %v471, 1
      %v807 = vpop.permute.xlu0 %806
      %808 = vrot.lane.b32.xlu0 %v473, 1
      %v809 = vpop.permute.xlu0 %808
      %810 = vrot.lane.b32.xlu0 %v477, 1
      %v811 = vpop.permute.xlu0 %810
      %812 = vrot.lane.b32.xlu0 %v479, 1
      %v813 = vpop.permute.xlu0 %812
      %v814 = vsel %vm656, %v807, %v809
      %v815 = vsel %vm656, %v811, %v813
      %v820 = vsel %vm656, 0.0, %v807
      %v821 = vsel %vm656, 0.0, %v811
      %v822 = vmul.f32 %v820, %v671
      %v823 = vmul.f32 %v814, %v675
      %v824 = vmul.f32 %v821, %v671
      %v825 = vmul.f32 %v815, %v675
      %v826 = vadd.f32 %v822, %v483
      %v827 = vadd.f32 %v823, %v485
      %v828 = vadd.f32 %v824, %v489
      %v829 = vadd.f32 %v825, %v491
      %834 = vrot.lane.b32.xlu0 %v495, 113
      %v835 = vpop.permute.xlu0 %834
      %836 = vrot.lane.b32.xlu0 %v497, 113
      %v837 = vpop.permute.xlu0 %836
      %838 = vrot.lane.b32.xlu0 %v501, 113
      %v839 = vpop.permute.xlu0 %838
      %840 = vrot.lane.b32.xlu0 %v503, 113
      %v841 = vpop.permute.xlu0 %840
      %vm842 = vcmask 924672
      %v843 = vsel %vm842, %v835, %v837
      %v844 = vsel %vm842, %v839, %v841
      %v849 = vsel %vm842, %v837, 0.0
      %v850 = vsel %vm842, %v841, 0.0
      %s851 = scalar_lea.vmem %s2, 6
      %v852 = vld [vmem:[%s851] ss:$8 sm:$0x3]
      %v854 = vlaneseq
      %v855 = vshrl.u32 %v854, 7
      %v856 = vsub.s32 0, %v855
      %v857 = vrot.slane %v852, %v856
      %v858 = vlaneseq
      %v859 = vshrl.u32 %v858, 7
      %v860 = vsub.s32 1, %v859
      %v861 = vrot.slane %v852, %v860
      %v864 = vmul.f32 %v843, %v857
      %v865 = vmul.f32 %v849, %v861
      %v866 = vmul.f32 %v844, %v857
      %v867 = vmul.f32 %v850, %v861
      %v868 = vadd.f32 %v826, %v864
      %v869 = vadd.f32 %v827, %v865
      %v870 = vadd.f32 %v828, %v866
      %v871 = vadd.f32 %v829, %v867
      %876 = vrot.lane.b32.xlu0 %v507, 112
      %v877 = vpop.permute.xlu0 %876
      %878 = vrot.lane.b32.xlu0 %v509, 112
      %v879 = vpop.permute.xlu0 %878
      %880 = vrot.lane.b32.xlu0 %v513, 112
      %v881 = vpop.permute.xlu0 %880
      %882 = vrot.lane.b32.xlu0 %v515, 112
      %v883 = vpop.permute.xlu0 %882
      %vm884 = vcmask 916480
      %v885 = vsel %vm884, %v877, %v879
      %v886 = vsel %vm884, %v881, %v883
      %v891 = vsel %vm884, %v879, 0.0
      %v892 = vsel %vm884, %v883, 0.0
      %s893 = scalar_lea.vmem %s2, 7
      %v894 = vld [vmem:[%s893] ss:$8 sm:$0x3]
      %v896 = vlaneseq
      %v897 = vshrl.u32 %v896, 7
      %v898 = vsub.s32 0, %v897
      %v899 = vrot.slane %v894, %v898
      %v900 = vlaneseq
      %v901 = vshrl.u32 %v900, 7
      %v902 = vsub.s32 1, %v901
      %v903 = vrot.slane %v894, %v902
      %v906 = vmul.f32 %v885, %v899
      %v907 = vmul.f32 %v891, %v903
      %v908 = vmul.f32 %v886, %v899
      %v909 = vmul.f32 %v892, %v903
      %v910 = vadd.f32 %v868, %v906
      %v911 = vadd.f32 %v869, %v907
      %v912 = vadd.f32 %v870, %v908
      %v913 = vadd.f32 %v871, %v909
      %918 = vrot.lane.b32.xlu0 %v531, 127
      %v919 = vpop.permute.xlu0 %918
      %920 = vrot.lane.b32.xlu0 %v533, 127
      %v921 = vpop.permute.xlu0 %920
      %922 = vrot.lane.b32.xlu0 %v537, 127
      %v923 = vpop.permute.xlu0 %922
      %924 = vrot.lane.b32.xlu0 %v539, 127
      %v925 = vpop.permute.xlu0 %924
      %v926 = vsel %vm772, %v919, %v921
      %v927 = vsel %vm772, %v923, %v925
      %v932 = vsel %vm772, %v921, 0.0
      %v933 = vsel %vm772, %v925, 0.0
      %v934 = vmul.f32 %v926, %v787
      %v935 = vmul.f32 %v932, %v791
      %v936 = vmul.f32 %v927, %v787
      %v937 = vmul.f32 %v933, %v791
      %v938 = vadd.f32 %v519, %v934
      %v939 = vadd.f32 %v521, %v935
      %v940 = vadd.f32 %v525, %v936
      %v941 = vadd.f32 %v527, %v937
      %946 = vrot.lane.b32.xlu0 %v543, 112
      %v947 = vpop.permute.xlu0 %946
      %948 = vrot.lane.b32.xlu0 %v545, 112
      %v949 = vpop.permute.xlu0 %948
      %950 = vrot.lane.b32.xlu0 %v549, 112
      %v951 = vpop.permute.xlu0 %950
      %952 = vrot.lane.b32.xlu0 %v551, 112
      %v953 = vpop.permute.xlu0 %952
      %v954 = vsel %vm884, %v947, %v949
      %v955 = vsel %vm884, %v951, %v953
      %v960 = vsel %vm884, %v949, 0.0
      %v961 = vsel %vm884, %v953, 0.0
      %v962 = vmul.f32 %v954, %v899
      %v963 = vmul.f32 %v960, %v903
      %v964 = vmul.f32 %v955, %v899
      %v965 = vmul.f32 %v961, %v903
      %v966 = vadd.f32 %v938, %v962
      %v967 = vadd.f32 %v939, %v963
      %v968 = vadd.f32 %v940, %v964
      %v969 = vadd.f32 %v941, %v965
      %974 = vrot.lane.b32.xlu0 %v555, 111
      %v975 = vpop.permute.xlu0 %974
      %976 = vrot.lane.b32.xlu0 %v557, 111
      %v977 = vpop.permute.xlu0 %976
      %978 = vrot.lane.b32.xlu0 %v561, 111
      %v979 = vpop.permute.xlu0 %978
      %980 = vrot.lane.b32.xlu0 %v563, 111
      %v981 = vpop.permute.xlu0 %980
      %vm982 = vcmask 908288
      %v983 = vsel %vm982, %v975, %v977
      %v984 = vsel %vm982, %v979, %v981
      %v989 = vsel %vm982, %v977, 0.0
      %v990 = vsel %vm982, %v981, 0.0
      %s991 = scalar_lea.vmem %s2, 16
      %v992 = vld [vmem:[%s991] ss:$8 sm:$0x3]
      %v994 = vlaneseq
      %v995 = vshrl.u32 %v994, 7
      %v996 = vsub.s32 0, %v995
      %v997 = vrot.slane %v992, %v996
      %v998 = vlaneseq
      %v999 = vshrl.u32 %v998, 7
      %v1000 = vsub.s32 1, %v999
      %v1001 = vrot.slane %v992, %v1000
      %v1004 = vmul.f32 %v983, %v997
      %v1005 = vmul.f32 %v989, %v1001
      %v1006 = vmul.f32 %v984, %v997
      %v1007 = vmul.f32 %v990, %v1001
      %v1008 = vadd.f32 %v966, %v1004
      %v1009 = vadd.f32 %v967, %v1005
      %v1010 = vadd.f32 %v968, %v1006
      %v1011 = vadd.f32 %v969, %v1007
      %v1012 = vadd.f32 %v686, %v687
      %1013 = vadd.xlane.f32.xlu0 %v1012
      %v1014 = vpop.xlane.xlu0 %1013
      %v1015 = vadd.f32 %v688, %v689
      %1016 = vadd.xlane.f32.xlu0 %v1015
      %v1017 = vpop.xlane.xlu0 %1016
      %v1018 = vadd.f32 %v798, %v799
      %1019 = vadd.xlane.f32.xlu0 %v1018
      %v1020 = vpop.xlane.xlu0 %1019
      %v1021 = vadd.f32 %v800, %v801
      %1022 = vadd.xlane.f32.xlu0 %v1021
      %v1023 = vpop.xlane.xlu0 %1022
      %v1024 = vadd.f32 %v1014, %v1020
      %v1025 = vadd.f32 %v1017, %v1023
      %v1026 = vadd.f32 %v910, %v911
      %1027 = vadd.xlane.f32.xlu0 %v1026
      %v1028 = vpop.xlane.xlu0 %1027
      %v1029 = vadd.f32 %v912, %v913
      %1030 = vadd.xlane.f32.xlu0 %v1029
      %v1031 = vpop.xlane.xlu0 %1030
      %v1032 = vadd.f32 %v1024, %v1028
      %v1033 = vadd.f32 %v1025, %v1031
      %v1034 = vadd.f32 %v1008, %v1009
      %1035 = vadd.xlane.f32.xlu0 %v1034
      %v1036 = vpop.xlane.xlu0 %1035
      %v1037 = vadd.f32 %v1010, %v1011
      %1038 = vadd.xlane.f32.xlu0 %v1037
      %v1039 = vpop.xlane.xlu0 %1038
      %v1040 = vadd.f32 %v1032, %v1036
      %v1041 = vadd.f32 %v1033, %v1039
      %v1042 = vmul.f32 %v1040, 0.0009765625
      %v1043 = vmul.f32 %v1041, 0.0009765625
      %v1044 = vsub.f32 %v686, %v1042
      %v1045 = vsub.f32 %v687, %v1042
      %v1046 = vsub.f32 %v688, %v1043
      %v1047 = vsub.f32 %v689, %v1043
      %v1048 = vmul.f32 %v1044, %v1044
      %v1049 = vmul.f32 %v1045, %v1045
      %v1050 = vmul.f32 %v1046, %v1046
      %v1051 = vmul.f32 %v1047, %v1047
      %v1052 = vadd.f32 %v1048, %v1049
      %1053 = vadd.xlane.f32.xlu0 %v1052
      %v1054 = vpop.xlane.xlu0 %1053
      %v1055 = vadd.f32 %v1050, %v1051
      %1056 = vadd.xlane.f32.xlu0 %v1055
      %v1057 = vpop.xlane.xlu0 %1056
      %v1058 = vsub.f32 %v798, %v1042
      %v1059 = vsub.f32 %v799, %v1042
      %v1060 = vsub.f32 %v800, %v1043
      %v1061 = vsub.f32 %v801, %v1043
      %v1062 = vmul.f32 %v1058, %v1058
      %v1063 = vmul.f32 %v1059, %v1059
      %v1064 = vmul.f32 %v1060, %v1060
      %v1065 = vmul.f32 %v1061, %v1061
      %v1066 = vadd.f32 %v1062, %v1063
      %1067 = vadd.xlane.f32.xlu0 %v1066
      %v1068 = vpop.xlane.xlu0 %1067
      %v1069 = vadd.f32 %v1064, %v1065
      %1070 = vadd.xlane.f32.xlu0 %v1069
      %v1071 = vpop.xlane.xlu0 %1070
      %v1072 = vadd.f32 %v1054, %v1068
      %v1073 = vadd.f32 %v1057, %v1071
      %v1074 = vsub.f32 %v910, %v1042
      %v1075 = vsub.f32 %v911, %v1042
      %v1076 = vsub.f32 %v912, %v1043
      %v1077 = vsub.f32 %v913, %v1043
      %v1078 = vmul.f32 %v1074, %v1074
      %v1079 = vmul.f32 %v1075, %v1075
      %v1080 = vmul.f32 %v1076, %v1076
      %v1081 = vmul.f32 %v1077, %v1077
      %v1082 = vadd.f32 %v1078, %v1079
      %1083 = vadd.xlane.f32.xlu0 %v1082
      %v1084 = vpop.xlane.xlu0 %1083
      %v1085 = vadd.f32 %v1080, %v1081
      %1086 = vadd.xlane.f32.xlu0 %v1085
      %v1087 = vpop.xlane.xlu0 %1086
      %v1088 = vadd.f32 %v1072, %v1084
      %v1089 = vadd.f32 %v1073, %v1087
      %v1090 = vsub.f32 %v1008, %v1042
      %v1091 = vsub.f32 %v1009, %v1042
      %v1092 = vsub.f32 %v1010, %v1043
      %v1093 = vsub.f32 %v1011, %v1043
      %v1094 = vmul.f32 %v1090, %v1090
      %v1095 = vmul.f32 %v1091, %v1091
      %v1096 = vmul.f32 %v1092, %v1092
      %v1097 = vmul.f32 %v1093, %v1093
      %v1098 = vadd.f32 %v1094, %v1095
      %1099 = vadd.xlane.f32.xlu0 %v1098
      %v1100 = vpop.xlane.xlu0 %1099
      %v1101 = vadd.f32 %v1096, %v1097
      %1102 = vadd.xlane.f32.xlu0 %v1101
      %v1103 = vpop.xlane.xlu0 %1102
      %v1104 = vadd.f32 %v1088, %v1100
      %v1105 = vadd.f32 %v1089, %v1103
      %v1106 = vmul.f32 %v1104, 0.0009765625
      %v1107 = vmul.f32 %v1105, 0.0009765625
      %v1108 = vadd.f32 %v1106, 1e-05
      %v1109 = vadd.f32 %v1107, 1e-05
      %v1110 = vrsqrt.pop %v1108
      %v1111 = vrsqrt.pop %v1109
      %v1112 = vmul.f32 %v1044, %v1110
      %v1113 = vmul.f32 %v1045, %v1110
      %v1114 = vmul.f32 %v1046, %v1111
      %v1115 = vmul.f32 %v1047, %v1111
      %v1116 = vsub.f32 0.0, %v1112
      %v1117 = vsub.f32 0.0, %v1113
      %v1118 = vsub.f32 0.0, %v1114
      %v1119 = vsub.f32 0.0, %v1115
      %v1120 = vmul.f32 %v1116, 1.442695
      %v1121 = vpow.pop %v1120
      %v1122 = vmul.f32 %v1117, 1.442695
      %v1123 = vpow.pop %v1122
      %v1124 = vmul.f32 %v1118, 1.442695
      %v1125 = vpow.pop %v1124
      %v1126 = vmul.f32 %v1119, 1.442695
      %v1127 = vpow.pop %v1126
      %v1128 = vadd.f32 %v1121, 1.0
      %v1129 = vadd.f32 %v1123, 1.0
      %v1130 = vadd.f32 %v1125, 1.0
      %v1131 = vadd.f32 %v1127, 1.0
      %v1132 = vrcp.pop %v1128
      %v1133 = vmul.f32 1.0, %v1132
      %v1134 = vrcp.pop %v1129
      %v1135 = vmul.f32 1.0, %v1134
      %v1136 = vrcp.pop %v1130
      %v1137 = vmul.f32 1.0, %v1136
      %v1138 = vrcp.pop %v1131
      %v1139 = vmul.f32 1.0, %v1138
      %v1140 = vmul.f32 %v1112, %v1133
      %v1141 = vmul.f32 %v1113, %v1135
      %v1142 = vmul.f32 %v1114, %v1137
      %v1143 = vmul.f32 %v1115, %v1139
      %1144 = vst [vmem:[%s170] sm:$0xff] %v1140
      %1145 = vst [vmem:[%s170 + $0x8] sm:$0xff] %v1141
      %1146 = vst [vmem:[%s170 + $0x10] sm:$0xff] %v1142
      %1147 = vst [vmem:[%s170 + $0x18] sm:$0xff] %v1143
      %v1148 = vmul.f32 %v1058, %v1110
      %v1149 = vmul.f32 %v1059, %v1110
      %v1150 = vmul.f32 %v1060, %v1111
      %v1151 = vmul.f32 %v1061, %v1111
      %v1152 = vsub.f32 0.0, %v1148
      %v1153 = vsub.f32 0.0, %v1149
      %v1154 = vsub.f32 0.0, %v1150
      %v1155 = vsub.f32 0.0, %v1151
      %v1156 = vmul.f32 %v1152, 1.442695
      %v1157 = vpow.pop %v1156
      %v1158 = vmul.f32 %v1153, 1.442695
      %v1159 = vpow.pop %v1158
      %v1160 = vmul.f32 %v1154, 1.442695
      %v1161 = vpow.pop %v1160
      %v1162 = vmul.f32 %v1155, 1.442695
      %v1163 = vpow.pop %v1162
      %v1164 = vadd.f32 %v1157, 1.0
      %v1165 = vadd.f32 %v1159, 1.0
      %v1166 = vadd.f32 %v1161, 1.0
      %v1167 = vadd.f32 %v1163, 1.0
      %v1168 = vrcp.pop %v1164
      %v1169 = vmul.f32 1.0, %v1168
      %v1170 = vrcp.pop %v1165
      %v1171 = vmul.f32 1.0, %v1170
      %v1172 = vrcp.pop %v1166
      %v1173 = vmul.f32 1.0, %v1172
      %v1174 = vrcp.pop %v1167
      %v1175 = vmul.f32 1.0, %v1174
      %v1176 = vmul.f32 %v1148, %v1169
      %v1177 = vmul.f32 %v1149, %v1171
      %v1178 = vmul.f32 %v1150, %v1173
      %v1179 = vmul.f32 %v1151, %v1175
      %s1180 = scalar_lea.vmem %s170, 32
      %1181 = vst [vmem:[%s1180] sm:$0xff] %v1176
      %1182 = vst [vmem:[%s1180 + $0x8] sm:$0xff] %v1177
      %1183 = vst [vmem:[%s1180 + $0x10] sm:$0xff] %v1178
      %1184 = vst [vmem:[%s1180 + $0x18] sm:$0xff] %v1179
      %v1185 = vmul.f32 %v1074, %v1110
      %v1186 = vmul.f32 %v1075, %v1110
      %v1187 = vmul.f32 %v1076, %v1111
      %v1188 = vmul.f32 %v1077, %v1111
      %v1189 = vsub.f32 0.0, %v1185
      %v1190 = vsub.f32 0.0, %v1186
      %v1191 = vsub.f32 0.0, %v1187
      %v1192 = vsub.f32 0.0, %v1188
      %v1193 = vmul.f32 %v1189, 1.442695
      %v1194 = vpow.pop %v1193
      %v1195 = vmul.f32 %v1190, 1.442695
      %v1196 = vpow.pop %v1195
      %v1197 = vmul.f32 %v1191, 1.442695
      %v1198 = vpow.pop %v1197
      %v1199 = vmul.f32 %v1192, 1.442695
      %v1200 = vpow.pop %v1199
      %v1201 = vadd.f32 %v1194, 1.0
      %v1202 = vadd.f32 %v1196, 1.0
      %v1203 = vadd.f32 %v1198, 1.0
      %v1204 = vadd.f32 %v1200, 1.0
      %v1205 = vrcp.pop %v1201
      %v1206 = vmul.f32 1.0, %v1205
      %v1207 = vrcp.pop %v1202
      %v1208 = vmul.f32 1.0, %v1207
      %v1209 = vrcp.pop %v1203
      %v1210 = vmul.f32 1.0, %v1209
      %v1211 = vrcp.pop %v1204
      %v1212 = vmul.f32 1.0, %v1211
      %v1213 = vmul.f32 %v1185, %v1206
      %v1214 = vmul.f32 %v1186, %v1208
      %v1215 = vmul.f32 %v1187, %v1210
      %v1216 = vmul.f32 %v1188, %v1212
      %s1217 = scalar_lea.vmem %s170, 64
      %1218 = vst [vmem:[%s1217] sm:$0xff] %v1213
      %1219 = vst [vmem:[%s1217 + $0x8] sm:$0xff] %v1214
      %1220 = vst [vmem:[%s1217 + $0x10] sm:$0xff] %v1215
      %1221 = vst [vmem:[%s1217 + $0x18] sm:$0xff] %v1216
      %v1222 = vmul.f32 %v1090, %v1110
      %v1223 = vmul.f32 %v1091, %v1110
      %v1224 = vmul.f32 %v1092, %v1111
      %v1225 = vmul.f32 %v1093, %v1111
      %v1226 = vsub.f32 0.0, %v1222
      %v1227 = vsub.f32 0.0, %v1223
      %v1228 = vsub.f32 0.0, %v1224
      %v1229 = vsub.f32 0.0, %v1225
      %v1230 = vmul.f32 %v1226, 1.442695
      %v1231 = vpow.pop %v1230
      %v1232 = vmul.f32 %v1227, 1.442695
      %v1233 = vpow.pop %v1232
      %v1234 = vmul.f32 %v1228, 1.442695
      %v1235 = vpow.pop %v1234
      %v1236 = vmul.f32 %v1229, 1.442695
      %v1237 = vpow.pop %v1236
      %v1238 = vadd.f32 %v1231, 1.0
      %v1239 = vadd.f32 %v1233, 1.0
      %v1240 = vadd.f32 %v1235, 1.0
      %v1241 = vadd.f32 %v1237, 1.0
      %v1242 = vrcp.pop %v1238
      %v1243 = vmul.f32 1.0, %v1242
      %v1244 = vrcp.pop %v1239
      %v1245 = vmul.f32 1.0, %v1244
      %v1246 = vrcp.pop %v1240
      %v1247 = vmul.f32 1.0, %v1246
      %v1248 = vrcp.pop %v1241
      %v1249 = vmul.f32 1.0, %v1248
      %v1250 = vmul.f32 %v1222, %v1243
      %v1251 = vmul.f32 %v1223, %v1245
      %v1252 = vmul.f32 %v1224, %v1247
      %v1253 = vmul.f32 %v1225, %v1249
      %s1254 = scalar_lea.vmem %s170, 96
      %1255 = vst [vmem:[%s1254] sm:$0xff] %v1250
      %1256 = vst [vmem:[%s1254 + $0x8] sm:$0xff] %v1251
      %1257 = vst [vmem:[%s1254 + $0x10] sm:$0xff] %v1252
      %1258 = vst [vmem:[%s1254 + $0x18] sm:$0xff] %v1253
      %p1259 = scmp.lt.s32.totalorder %s14, 1
      %s1260 = scalar_select %p1259, %s14, 1
      %s1261 = smul.addr %s1260, 16
      %s1262 = smul.addr %s1261, 8
      %s1263 = scalar_lea.vmem %s3, %s1262
      // Predicated region
      $region33: #{upsample_forward.1} parent=31 // pred_check
        %p1264 = pneg %p100
      $region34: #{upsample_forward.1} parent=31 // pred_check_branch
        %1266 = sbr.rel (%p1264) target = $region36
      $region35: #{upsample_forward.1} parent=31 // pred_region
        _
      $region36: #{upsample_forward.1} parent=31 // pred_fallthru
        _
    $region32: #{upsample_forward.1} parent=5 // pred_fallthru
      _
    %p1267 = scmp.le.s32.totalorder 2, %s9
    // Predicated region
    $region37: #{upsample_forward.1} parent=5 // pred_check
      %p1268 = pneg %p1267
    $region38: #{upsample_forward.1} parent=5 // pred_check_branch
      %1270 = sbr.rel (%p1268) target = $region40
    $region39: #{upsample_forward.1} parent=5 // pred_region
      %s1271 = ssub.s32 %s9, 2
      // Predicated region
      $region41: #{upsample_forward.1} parent=39 // pred_check
        %p1272 = pneg %p106
      $region42: #{upsample_forward.1} parent=39 // pred_check_branch
        %1274 = sbr.rel (%p1272) target = $region44
      $region43: #{upsample_forward.1} parent=39 // pred_region
        %p1275 = scmp.lt.s32.totalorder %s15, 1
        %s1276 = scalar_select %p1275, %s15, 1
        %s1277 = smul.addr %s1276, 16
        %s1278 = smul.addr %s1277, 8
        %s1279 = scalar_lea.vmem %s3, %s1278
      $region44: #{upsample_forward.1} parent=39 // pred_fallthru
        _
    $region40: #{upsample_forward.1} parent=5 // pred_fallthru
      _
  $region6: #{upsample_forward.1} parent=0 // loop_footer
    %s13 = sadd.s32 1, %s9
  $region7: #{upsample_forward.1} parent=0 // loop_footer_branch
    %8 = sbr.rel target = $region3
  $region8: #{upsample_forward.1} parent=0 // loop_exit
    _

</llo_original>
